<compile_context>
chip_gen: v6e
topology: v6e:2x2x1
jax: 0.10.0
libtpu: 0.0.40
codegen_flags: <defaults>
</compile_context>

<pallas_src>
import math
import functools

import jax
import jax.numpy as jnp
from jax import lax
from jax.experimental import pallas as pl
from jax.experimental.pallas import tpu as pltpu


def _attention_kernel(g_ref, wq_ref, wk_ref, wv_ref, wo_ref, x_ref, o_ref,
                      xn_scr, k_scr, v_scr, q_scr, m_scr, l_scr, acc_scr,
                      *, n_head, head_dim, q_tile, kv_tile, eps):
    qi = pl.program_id(1)
    ki = pl.program_id(2)
    nkv = pl.num_programs(2)
    H, hd = n_head, head_dim

    # ---- (1) once per batch element: RMSNorm the full sequence -------------
    @pl.when((qi == 0) & (ki == 0))
    def _():
        x = x_ref[0].astype(jnp.float32)                    # (N, D) f32
        ms = jnp.mean(x * x, axis=-1, keepdims=True)        # (N, 1) f32
        xn = x * lax.rsqrt(ms + eps) * g_ref[...]           # (N, D) f32
        xn_scr[...] = xn.astype(jnp.bfloat16)

    # ---- (2) once per (batch, kv tile): K/V projection (wide matmuls) ------
    @pl.when(qi == 0)
    def _():
        kst = pl.multiple_of(ki * kv_tile, kv_tile)
        xkv = xn_scr[pl.ds(kst, kv_tile), :]                # (TK, D) bf16
        k = jnp.dot(xkv, wk_ref[...],
                    preferred_element_type=jnp.float32)     # (TK, D) f32
        v = jnp.dot(xkv, wv_ref[...],
                    preferred_element_type=jnp.float32)     # (TK, D) f32
        kb = k.astype(jnp.bfloat16)
        vb = v.astype(jnp.bfloat16)
        for h in range(H):                                  # static head repack
            k_scr[ki, h] = kb[:, h * hd:(h + 1) * hd]
            v_scr[ki, h] = vb[:, h * hd:(h + 1) * hd]

    # ---- (3) once per (batch, q tile): Q projection + online-softmax init --
    @pl.when(ki == 0)
    def _():
        qst = pl.multiple_of(qi * q_tile, q_tile)
        xq = xn_scr[pl.ds(qst, q_tile), :]                  # (TQ, D) bf16
        # NOTE: 1/sqrt(head_dim) is folded into wq by the wrapper.
        q = jnp.dot(xq, wq_ref[...],
                    preferred_element_type=jnp.float32)     # (TQ, D) f32
        qb = q.astype(jnp.bfloat16)
        for h in range(H):
            q_scr[h] = qb[:, h * hd:(h + 1) * hd]
        m_scr[...] = jnp.full(m_scr.shape, -jnp.inf, dtype=m_scr.dtype)
        l_scr[...] = jnp.zeros(l_scr.shape, dtype=l_scr.dtype)
        acc_scr[...] = jnp.zeros(acc_scr.shape, dtype=acc_scr.dtype)

    # ---- (4) flash-attention step over this KV tile -------------------------
    k = k_scr[ki]                                           # (H, TK, hd) bf16
    v = v_scr[ki]                                           # (H, TK, hd) bf16
    s = lax.dot_general(q_scr[...], k, (((2,), (2,)), ((0,), (0,))),
                        preferred_element_type=jnp.float32)  # (H, TQ, TK) f32
    m_prev = m_scr[...]
    m_new = jnp.maximum(m_prev, jnp.max(s, axis=-1, keepdims=True))
    alpha = jnp.exp(m_prev - m_new)
    p = jnp.exp(s - m_new)                                   # f32 (keep v5e-safe)
    l_scr[...] = alpha * l_scr[...] + jnp.sum(p, axis=-1, keepdims=True)
    acc_scr[...] = alpha * acc_scr[...] + lax.dot_general(
        p.astype(jnp.bfloat16), v, (((2,), (1,)), ((0,), (0,))),
        preferred_element_type=jnp.float32)                  # (H, TQ, hd) f32
    m_scr[...] = m_new

    # ---- (5) last KV tile: normalize, merge heads, single out projection ----
    @pl.when(ki == nkv - 1)
    def _():
        o = acc_scr[...] * pl.reciprocal(l_scr[...], approx=True)  # (H,TQ,hd)
        ob = o.astype(jnp.bfloat16)
        o_merged = jnp.concatenate([ob[h] for h in range(H)], axis=-1)  # (TQ,D)
        y = jnp.dot(o_merged, wo_ref[...],
                    preferred_element_type=jnp.float32)       # (TQ, D) f32
        o_ref[0] = y.astype(o_ref.dtype)
    # TODO(synk): training-mode dropout (p=0.1) not implemented; eval semantics.


def _vmem_capacity_bytes():
    try:
        return int(pltpu.get_tpu_info().vmem_capacity_bytes)
    except Exception:
        return 128 * 1024 * 1024


def _const_spec(block_shape, index_map):
    """Constant-index (weight) BlockSpec, single-buffered when supported."""
    try:
        return pl.BlockSpec(block_shape, index_map,
                            pipeline_mode=pl.Buffered(1))
    except Exception:
        return pl.BlockSpec(block_shape, index_map)


def attention_forward(x, rms_weight, w_qkv, w_out, *, n_head, eps=1e-5,
                      q_tile=None, kv_tile=None):
    """x: (B, N, D) f32.  Returns (B, N, D) f32 (eval-mode Attention.forward)."""
    B, N, D = x.shape
    assert D % n_head == 0
    hd = D // n_head

    vmem_cap = _vmem_capacity_bytes()
    small_vmem = vmem_cap <= 64 * 1024 * 1024     # v7x: 64 MiB per TensorCore
    if q_tile is None:
        q_tile = 128 if small_vmem else 256
    if kv_tile is None:
        kv_tile = 128 if small_vmem else 256
    q_tile = min(q_tile, N)
    kv_tile = min(kv_tile, N)
    assert N % q_tile == 0 and N % kv_tile == 0, "N must divide by the tiles"
    # bf16 scratch packs 16 rows per vreg sublane group -> keep tiles x16.
    assert q_tile == N or q_tile % 16 == 0
    assert kv_tile == N or kv_tile % 16 == 0
    nq = N // q_tile
    nkv = N // kv_tile

    # Repack weights: w_qkv columns are '(k h d)' -> [Q | K | V], head-major.
    w_qkv = jnp.asarray(w_qkv, jnp.float32)
    scale = 1.0 / math.sqrt(hd)
    wq = (w_qkv[:, 0:D] * scale).astype(jnp.bfloat16)        # (D, D), pre-scaled
    wk = w_qkv[:, D:2 * D].astype(jnp.bfloat16)              # (D, D)
    wv = w_qkv[:, 2 * D:3 * D].astype(jnp.bfloat16)          # (D, D)
    wo = jnp.asarray(w_out, jnp.float32).astype(jnp.bfloat16)  # (D, D), head-major rows
    g = jnp.asarray(rms_weight, jnp.float32).reshape(1, D)
    xb = x.astype(jnp.bfloat16)                              # halve x DMA / VMEM

    kernel = functools.partial(_attention_kernel, n_head=n_head, head_dim=hd,
                               q_tile=q_tile, kv_tile=kv_tile, eps=eps)

    cost = pl.CostEstimate(
        flops=8 * B * N * D * D + 4 * B * N * N * D,
        transcendentals=B * n_head * N * N,
        bytes_accessed=B * N * D * 2 + B * N * D * 4 + 4 * D * D * 2 + D * 4)

    vmem_limit = max(32 * 1024 * 1024,
                     min(3 * vmem_cap // 4, 100 * 1024 * 1024))

    return pl.pallas_call(
        kernel,
        out_shape=jax.ShapeDtypeStruct((B, N, D), jnp.float32),
        grid_spec=pltpu.PrefetchScalarGridSpec(
            num_scalar_prefetch=0,
            grid=(B, nq, nkv),
            in_specs=[
                _const_spec((1, D), lambda b, q, k: (0, 0)),   # rms weight
                _const_spec((D, D), lambda b, q, k: (0, 0)),   # Wq (pre-scaled)
                _const_spec((D, D), lambda b, q, k: (0, 0)),   # Wk
                _const_spec((D, D), lambda b, q, k: (0, 0)),   # Wv
                _const_spec((D, D), lambda b, q, k: (0, 0)),   # Wout
                pl.BlockSpec((1, N, D), lambda b, q, k: (b, 0, 0)),  # x (per b)
            ],
            out_specs=pl.BlockSpec((1, q_tile, D), lambda b, q, k: (b, q, 0)),
            scratch_shapes=[
                pltpu.VMEM((N, D), jnp.bfloat16),                     # normed x
                pltpu.VMEM((nkv, n_head, kv_tile, hd), jnp.bfloat16),  # K tiles
                pltpu.VMEM((nkv, n_head, kv_tile, hd), jnp.bfloat16),  # V tiles
                pltpu.VMEM((n_head, q_tile, hd), jnp.bfloat16),        # Q tile
                pltpu.VMEM((n_head, q_tile, 1), jnp.float32),          # running max
                pltpu.VMEM((n_head, q_tile, 1), jnp.float32),          # running sum
                pltpu.VMEM((n_head, q_tile, hd), jnp.float32),         # accumulator
            ]),
        compiler_params=pltpu.CompilerParams(
            # q/kv axes must stay sequential: persistent K/V scratch is filled
            # at qi==0 and the kv axis carries the online-softmax state.
            dimension_semantics=("parallel", "arbitrary", "arbitrary"),
            vmem_limit_bytes=vmem_limit),
        cost_estimate=cost,
    )(g, wq, wk, wv, wo, xb)


def attention_reference(x, rms_weight, w_qkv, w_out, *, n_head, eps=1e-5):
    """Pure-JAX f32 reference mirroring the PyTorch forward (eval mode)."""
    B, N, D = x.shape
    hd = D // n_head
    ms = jnp.mean(x * x, axis=-1, keepdims=True)
    xn = x * jax.lax.rsqrt(ms + eps) * jnp.asarray(rms_weight).reshape(D)
    qkv = xn @ w_qkv                                     # (B, N, 3D)
    qkv = qkv.reshape(B, N, 3, n_head, hd)               # 'b n (k h d)'
    q = jnp.transpose(qkv[:, :, 0], (0, 2, 1, 3))        # (B, H, N, hd)
    k = jnp.transpose(qkv[:, :, 1], (0, 2, 1, 3))
    v = jnp.transpose(qkv[:, :, 2], (0, 2, 1, 3))
    s = jnp.einsum('bhnd,bhmd->bhnm', q, k) / math.sqrt(hd)
    p = jax.nn.softmax(s, axis=-1)
    o = jnp.einsum('bhnm,bhmd->bhnd', p, v)              # (B, H, N, hd)
    o = jnp.transpose(o, (0, 2, 1, 3)).reshape(B, N, D)  # 'b l (h d)'
    return o @ w_out


if __name__ == "__main__":
    B, N, D, H = 2, 64, 32, 4     # head_dim = 8

    key = jax.random.PRNGKey(0)
    kx, kq, ko = jax.random.split(key, 3)

    x = jax.random.normal(kx, (B, N, D), dtype=jnp.float32)
    # Deterministic synthetic parameters (nn.Linear-like scale, no bias).
    rms_weight = jnp.ones((D,), dtype=jnp.float32)
    w_qkv = jax.random.normal(kq, (D, 3 * D), dtype=jnp.float32) / math.sqrt(D)
    w_out = jax.random.normal(ko, (D, D), dtype=jnp.float32) / math.sqrt(D)

    # Small tiles so the flash q/kv tiling path is actually exercised.
    out = attention_forward(x, rms_weight, w_qkv, w_out, n_head=H,
                            q_tile=16, kv_tile=32)
    out = jax.block_until_ready(out)

    ref = attention_reference(x, rms_weight, w_qkv, w_out, n_head=H)
    assert out.shape == (B, N, D)
    max_err = float(jnp.max(jnp.abs(out - ref)))
    # bf16 operands + approx reciprocal -> loosened tolerance vs f32 ref.
    assert jnp.allclose(out, ref, atol=5e-2, rtol=5e-2), (
        f"mismatch vs reference (max abs err {max_err:.4g})")
    print("KERNEL_OK")
</pallas_src>

<mosaic_0001>
module attributes {stable_mosaic.version = 11 : i64} {
  func.func @_attention_kernel(%arg0: i32, %arg1: i32, %arg2: i32, %arg3: memref<1x32xf32, #tpu.memory_space<vmem>>, %arg4: memref<32x32xbf16, #tpu.memory_space<vmem>>, %arg5: memref<32x32xbf16, #tpu.memory_space<vmem>>, %arg6: memref<32x32xbf16, #tpu.memory_space<vmem>>, %arg7: memref<32x32xbf16, #tpu.memory_space<vmem>>, %arg8: memref<1x64x32xbf16, #tpu.memory_space<vmem>>, %arg9: memref<1x16x32xf32, #tpu.memory_space<vmem>>, %arg10: memref<64x32xbf16, #tpu.memory_space<vmem>>, %arg11: memref<2x4x32x8xbf16, #tpu.memory_space<vmem>>, %arg12: memref<2x4x32x8xbf16, #tpu.memory_space<vmem>>, %arg13: memref<4x16x8xbf16, #tpu.memory_space<vmem>>, %arg14: memref<4x16x1xf32, #tpu.memory_space<vmem>>, %arg15: memref<4x16x1xf32, #tpu.memory_space<vmem>>, %arg16: memref<4x16x8xf32, #tpu.memory_space<vmem>>) attributes {dimension_semantics = [#tpu.dimension_semantics<parallel>, #tpu.dimension_semantics<arbitrary>, #tpu.dimension_semantics<arbitrary>], iteration_bounds = array<i64: 2, 4, 2>, scalar_prefetch = 0 : i64, scratch_operands = 7 : i64, tpu.core_type = #tpu.core_type<tc>, window_params = [{pipeline_mode = #tpu.pipeline_mode<synchronous>, transform_indices = @transform_0, window_bounds = array<i64: 1, 32>}, {pipeline_mode = #tpu.pipeline_mode<synchronous>, transform_indices = @transform_1, window_bounds = array<i64: 32, 32>}, {pipeline_mode = #tpu.pipeline_mode<synchronous>, transform_indices = @transform_2, window_bounds = array<i64: 32, 32>}, {pipeline_mode = #tpu.pipeline_mode<synchronous>, transform_indices = @transform_3, window_bounds = array<i64: 32, 32>}, {pipeline_mode = #tpu.pipeline_mode<synchronous>, transform_indices = @transform_4, window_bounds = array<i64: 32, 32>}, {transform_indices = @transform_5, window_bounds = array<i64: 1, 64, 32>}, {transform_indices = @transform_6, window_bounds = array<i64: 1, 16, 32>}]} {
    %c0_i32 = arith.constant 0 : i32
    %0 = arith.cmpi eq, %arg1, %c0_i32 : i32
    %c0_i32_0 = arith.constant 0 : i32
    %1 = arith.cmpi eq, %arg2, %c0_i32_0 : i32
    %2 = arith.andi %0, %1 : i1
    %3 = arith.extui %2 : i1 to i32
    %c0_i32_1 = arith.constant 0 : i32
    %4 = arith.cmpi ne, %3, %c0_i32_1 : i32
    scf.if %4 {
      %c0_36 = arith.constant 0 : index
      %c0_37 = arith.constant 0 : index
      %c0_38 = arith.constant 0 : index
      %45 = vector.load %arg8[%c0_36, %c0_37, %c0_38] : memref<1x64x32xbf16, #tpu.memory_space<vmem>>, vector<1x64x32xbf16>
      %46 = vector.shape_cast %45 : vector<1x64x32xbf16> to vector<64x32xbf16>
      %47 = arith.extf %46 : vector<64x32xbf16> to vector<64x32xf32>
      %48 = arith.mulf %47, %47 : vector<64x32xf32>
      %cst_39 = arith.constant dense<0.000000e+00> : vector<64xf32>
      %49 = vector.multi_reduction <add>, %48, %cst_39 [1] : vector<64x32xf32> to vector<64xf32>
      %50 = vector.shape_cast %49 : vector<64xf32> to vector<64x1xf32>
      %cst_40 = arith.constant 3.200000e+01 : f32
      %51 = vector.broadcast %cst_40 : f32 to vector<64x1xf32>
      %52 = arith.divf %50, %51 : vector<64x1xf32>
      %cst_41 = arith.constant 9.99999974E-6 : f32
      %53 = vector.broadcast %cst_41 : f32 to vector<64x1xf32>
      %54 = arith.addf %52, %53 : vector<64x1xf32>
      %55 = math.rsqrt %54 : vector<64x1xf32>
      %56 = vector.broadcast %55 : vector<64x1xf32> to vector<64x32xf32>
      %57 = arith.mulf %47, %56 : vector<64x32xf32>
      %c0_42 = arith.constant 0 : index
      %c0_43 = arith.constant 0 : index
      %58 = vector.load %arg3[%c0_42, %c0_43] : memref<1x32xf32, #tpu.memory_space<vmem>>, vector<1x32xf32>
      %59 = vector.broadcast %58 : vector<1x32xf32> to vector<64x32xf32>
      %60 = arith.mulf %57, %59 : vector<64x32xf32>
      %61 = arith.truncf %60 : vector<64x32xf32> to vector<64x32xbf16>
      %c0_44 = arith.constant 0 : index
      %c0_45 = arith.constant 0 : index
      %62 = vector.load %arg10[%c0_44, %c0_45] : memref<64x32xbf16, #tpu.memory_space<vmem>>, vector<64x32xbf16>
      tpu.vector_store %arg10[%c0_44, %c0_45], %61 {strides = array<i32>} : memref<64x32xbf16, #tpu.memory_space<vmem>>, vector<64x32xbf16>,
    } else {
    }
    %c0_i32_2 = arith.constant 0 : i32
    %5 = arith.cmpi eq, %arg1, %c0_i32_2 : i32
    %6 = arith.extui %5 : i1 to i32
    %c0_i32_3 = arith.constant 0 : i32
    %7 = arith.cmpi ne, %6, %c0_i32_3 : i32
    scf.if %7 {
      %c32_i32 = arith.constant 32 : i32
      %45 = arith.muli %arg2, %c32_i32 : i32
      %46 = tpu.assume_multiple %45, 32 : i32
      %47 = arith.index_cast %46 : i32 to index
      %c0_36 = arith.constant 0 : index
      %48 = vector.load %arg10[%47, %c0_36] : memref<64x32xbf16, #tpu.memory_space<vmem>>, vector<32x32xbf16>
      %c0_37 = arith.constant 0 : index
      %c0_38 = arith.constant 0 : index
      %49 = vector.load %arg5[%c0_37, %c0_38] : memref<32x32xbf16, #tpu.memory_space<vmem>>, vector<32x32xbf16>
      %cst_39 = arith.constant dense<0.000000e+00> : vector<32x32xf32>
      %50 = tpu.matmul %48, %49, %cst_39 {dimension_numbers = #tpu.dot_dimension_numbers<[1], [0], [0], [1], [0, 0, 1, 1], [], []>} : vector<32x32xbf16>, vector<32x32xbf16>, vector<32x32xf32> -> vector<32x32xf32>
      %c0_40 = arith.constant 0 : index
      %c0_41 = arith.constant 0 : index
      %51 = vector.load %arg6[%c0_40, %c0_41] : memref<32x32xbf16, #tpu.memory_space<vmem>>, vector<32x32xbf16>
      %cst_42 = arith.constant dense<0.000000e+00> : vector<32x32xf32>
      %52 = tpu.matmul %48, %51, %cst_42 {dimension_numbers = #tpu.dot_dimension_numbers<[1], [0], [0], [1], [0, 0, 1, 1], [], []>} : vector<32x32xbf16>, vector<32x32xbf16>, vector<32x32xf32> -> vector<32x32xf32>
      %53 = arith.truncf %50 : vector<32x32xf32> to vector<32x32xbf16>
      %54 = arith.truncf %52 : vector<32x32xf32> to vector<32x32xbf16>
      %55 = vector.extract_strided_slice %53 {offsets = [0, 0], sizes = [32, 8], strides = [1, 1]} : vector<32x32xbf16> to vector<32x8xbf16>
      %56 = arith.index_cast %arg2 : i32 to index
      %c0_43 = arith.constant 0 : index
      %c0_44 = arith.constant 0 : index
      %c0_45 = arith.constant 0 : index
      %57 = vector.load %arg11[%56, %c0_43, %c0_44, %c0_45] : memref<2x4x32x8xbf16, #tpu.memory_space<vmem>>, vector<1x1x32x8xbf16>
      %58 = vector.shape_cast %57 : vector<1x1x32x8xbf16> to vector<32x8xbf16>
      %59 = vector.shape_cast %55 : vector<32x8xbf16> to vector<1x1x32x8xbf16>
      tpu.vector_store %arg11[%56, %c0_43, %c0_44, %c0_45], %59 {strides = array<i32>} : memref<2x4x32x8xbf16, #tpu.memory_space<vmem>>, vector<1x1x32x8xbf16>,
      %60 = vector.extract_strided_slice %54 {offsets = [0, 0], sizes = [32, 8], strides = [1, 1]} : vector<32x32xbf16> to vector<32x8xbf16>
      %61 = arith.index_cast %arg2 : i32 to index
      %c0_46 = arith.constant 0 : index
      %c0_47 = arith.constant 0 : index
      %c0_48 = arith.constant 0 : index
      %62 = vector.load %arg12[%61, %c0_46, %c0_47, %c0_48] : memref<2x4x32x8xbf16, #tpu.memory_space<vmem>>, vector<1x1x32x8xbf16>
      %63 = vector.shape_cast %62 : vector<1x1x32x8xbf16> to vector<32x8xbf16>
      %64 = vector.shape_cast %60 : vector<32x8xbf16> to vector<1x1x32x8xbf16>
      tpu.vector_store %arg12[%61, %c0_46, %c0_47, %c0_48], %64 {strides = array<i32>} : memref<2x4x32x8xbf16, #tpu.memory_space<vmem>>, vector<1x1x32x8xbf16>,
      %65 = vector.extract_strided_slice %53 {offsets = [0, 8], sizes = [32, 8], strides = [1, 1]} : vector<32x32xbf16> to vector<32x8xbf16>
      %66 = arith.index_cast %arg2 : i32 to index
      %c1 = arith.constant 1 : index
      %c0_49 = arith.constant 0 : index
      %c0_50 = arith.constant 0 : index
      %67 = vector.load %arg11[%66, %c1, %c0_49, %c0_50] : memref<2x4x32x8xbf16, #tpu.memory_space<vmem>>, vector<1x1x32x8xbf16>
      %68 = vector.shape_cast %67 : vector<1x1x32x8xbf16> to vector<32x8xbf16>
      %69 = vector.shape_cast %65 : vector<32x8xbf16> to vector<1x1x32x8xbf16>
      tpu.vector_store %arg11[%66, %c1, %c0_49, %c0_50], %69 {strides = array<i32>} : memref<2x4x32x8xbf16, #tpu.memory_space<vmem>>, vector<1x1x32x8xbf16>,
      %70 = vector.extract_strided_slice %54 {offsets = [0, 8], sizes = [32, 8], strides = [1, 1]} : vector<32x32xbf16> to vector<32x8xbf16>
      %71 = arith.index_cast %arg2 : i32 to index
      %c1_51 = arith.constant 1 : index
      %c0_52 = arith.constant 0 : index
      %c0_53 = arith.constant 0 : index
      %72 = vector.load %arg12[%71, %c1_51, %c0_52, %c0_53] : memref<2x4x32x8xbf16, #tpu.memory_space<vmem>>, vector<1x1x32x8xbf16>
      %73 = vector.shape_cast %72 : vector<1x1x32x8xbf16> to vector<32x8xbf16>
      %74 = vector.shape_cast %70 : vector<32x8xbf16> to vector<1x1x32x8xbf16>
      tpu.vector_store %arg12[%71, %c1_51, %c0_52, %c0_53], %74 {strides = array<i32>} : memref<2x4x32x8xbf16, #tpu.memory_space<vmem>>, vector<1x1x32x8xbf16>,
      %75 = vector.extract_strided_slice %53 {offsets = [0, 16], sizes = [32, 8], strides = [1, 1]} : vector<32x32xbf16> to vector<32x8xbf16>
      %76 = arith.index_cast %arg2 : i32 to index
      %c2 = arith.constant 2 : index
      %c0_54 = arith.constant 0 : index
      %c0_55 = arith.constant 0 : index
      %77 = vector.load %arg11[%76, %c2, %c0_54, %c0_55] : memref<2x4x32x8xbf16, #tpu.memory_space<vmem>>, vector<1x1x32x8xbf16>
      %78 = vector.shape_cast %77 : vector<1x1x32x8xbf16> to vector<32x8xbf16>
      %79 = vector.shape_cast %75 : vector<32x8xbf16> to vector<1x1x32x8xbf16>
      tpu.vector_store %arg11[%76, %c2, %c0_54, %c0_55], %79 {strides = array<i32>} : memref<2x4x32x8xbf16, #tpu.memory_space<vmem>>, vector<1x1x32x8xbf16>,
      %80 = vector.extract_strided_slice %54 {offsets = [0, 16], sizes = [32, 8], strides = [1, 1]} : vector<32x32xbf16> to vector<32x8xbf16>
      %81 = arith.index_cast %arg2 : i32 to index
      %c2_56 = arith.constant 2 : index
      %c0_57 = arith.constant 0 : index
      %c0_58 = arith.constant 0 : index
      %82 = vector.load %arg12[%81, %c2_56, %c0_57, %c0_58] : memref<2x4x32x8xbf16, #tpu.memory_space<vmem>>, vector<1x1x32x8xbf16>
      %83 = vector.shape_cast %82 : vector<1x1x32x8xbf16> to vector<32x8xbf16>
      %84 = vector.shape_cast %80 : vector<32x8xbf16> to vector<1x1x32x8xbf16>
      tpu.vector_store %arg12[%81, %c2_56, %c0_57, %c0_58], %84 {strides = array<i32>} : memref<2x4x32x8xbf16, #tpu.memory_space<vmem>>, vector<1x1x32x8xbf16>,
      %85 = vector.extract_strided_slice %53 {offsets = [0, 24], sizes = [32, 8], strides = [1, 1]} : vector<32x32xbf16> to vector<32x8xbf16>
      %86 = arith.index_cast %arg2 : i32 to index
      %c3 = arith.constant 3 : index
      %c0_59 = arith.constant 0 : index
      %c0_60 = arith.constant 0 : index
      %87 = vector.load %arg11[%86, %c3, %c0_59, %c0_60] : memref<2x4x32x8xbf16, #tpu.memory_space<vmem>>, vector<1x1x32x8xbf16>
      %88 = vector.shape_cast %87 : vector<1x1x32x8xbf16> to vector<32x8xbf16>
      %89 = vector.shape_cast %85 : vector<32x8xbf16> to vector<1x1x32x8xbf16>
      tpu.vector_store %arg11[%86, %c3, %c0_59, %c0_60], %89 {strides = array<i32>} : memref<2x4x32x8xbf16, #tpu.memory_space<vmem>>, vector<1x1x32x8xbf16>,
      %90 = vector.extract_strided_slice %54 {offsets = [0, 24], sizes = [32, 8], strides = [1, 1]} : vector<32x32xbf16> to vector<32x8xbf16>
      %91 = arith.index_cast %arg2 : i32 to index
      %c3_61 = arith.constant 3 : index
      %c0_62 = arith.constant 0 : index
      %c0_63 = arith.constant 0 : index
      %92 = vector.load %arg12[%91, %c3_61, %c0_62, %c0_63] : memref<2x4x32x8xbf16, #tpu.memory_space<vmem>>, vector<1x1x32x8xbf16>
      %93 = vector.shape_cast %92 : vector<1x1x32x8xbf16> to vector<32x8xbf16>
      %94 = vector.shape_cast %90 : vector<32x8xbf16> to vector<1x1x32x8xbf16>
      tpu.vector_store %arg12[%91, %c3_61, %c0_62, %c0_63], %94 {strides = array<i32>} : memref<2x4x32x8xbf16, #tpu.memory_space<vmem>>, vector<1x1x32x8xbf16>,
    } else {
    }
    %c0_i32_4 = arith.constant 0 : i32
    %8 = arith.cmpi eq, %arg2, %c0_i32_4 : i32
    %9 = arith.extui %8 : i1 to i32
    %c0_i32_5 = arith.constant 0 : i32
    %10 = arith.cmpi ne, %9, %c0_i32_5 : i32
    scf.if %10 {
      %c16_i32 = arith.constant 16 : i32
      %45 = arith.muli %arg1, %c16_i32 : i32
      %46 = tpu.assume_multiple %45, 16 : i32
      %47 = arith.index_cast %46 : i32 to index
      %c0_36 = arith.constant 0 : index
      %48 = vector.load %arg10[%47, %c0_36] : memref<64x32xbf16, #tpu.memory_space<vmem>>, vector<16x32xbf16>
      %c0_37 = arith.constant 0 : index
      %c0_38 = arith.constant 0 : index
      %49 = vector.load %arg4[%c0_37, %c0_38] : memref<32x32xbf16, #tpu.memory_space<vmem>>, vector<32x32xbf16>
      %cst_39 = arith.constant dense<0.000000e+00> : vector<16x32xf32>
      %50 = tpu.matmul %48, %49, %cst_39 {dimension_numbers = #tpu.dot_dimension_numbers<[1], [0], [0], [1], [0, 0, 1, 1], [], []>} : vector<16x32xbf16>, vector<32x32xbf16>, vector<16x32xf32> -> vector<16x32xf32>
      %51 = arith.truncf %50 : vector<16x32xf32> to vector<16x32xbf16>
      %52 = vector.extract_strided_slice %51 {offsets = [0, 0], sizes = [16, 8], strides = [1, 1]} : vector<16x32xbf16> to vector<16x8xbf16>
      %c0_40 = arith.constant 0 : index
      %c0_41 = arith.constant 0 : index
      %c0_42 = arith.constant 0 : index
      %53 = vector.load %arg13[%c0_40, %c0_41, %c0_42] : memref<4x16x8xbf16, #tpu.memory_space<vmem>>, vector<1x16x8xbf16>
      %54 = vector.shape_cast %53 : vector<1x16x8xbf16> to vector<16x8xbf16>
      %55 = vector.shape_cast %52 : vector<16x8xbf16> to vector<1x16x8xbf16>
      tpu.vector_store %arg13[%c0_40, %c0_41, %c0_42], %55 {strides = array<i32>} : memref<4x16x8xbf16, #tpu.memory_space<vmem>>, vector<1x16x8xbf16>,
      %56 = vector.extract_strided_slice %51 {offsets = [0, 8], sizes = [16, 8], strides = [1, 1]} : vector<16x32xbf16> to vector<16x8xbf16>
      %c1 = arith.constant 1 : index
      %c0_43 = arith.constant 0 : index
      %c0_44 = arith.constant 0 : index
      %57 = vector.load %arg13[%c1, %c0_43, %c0_44] : memref<4x16x8xbf16, #tpu.memory_space<vmem>>, vector<1x16x8xbf16>
      %58 = vector.shape_cast %57 : vector<1x16x8xbf16> to vector<16x8xbf16>
      %59 = vector.shape_cast %56 : vector<16x8xbf16> to vector<1x16x8xbf16>
      tpu.vector_store %arg13[%c1, %c0_43, %c0_44], %59 {strides = array<i32>} : memref<4x16x8xbf16, #tpu.memory_space<vmem>>, vector<1x16x8xbf16>,
      %60 = vector.extract_strided_slice %51 {offsets = [0, 16], sizes = [16, 8], strides = [1, 1]} : vector<16x32xbf16> to vector<16x8xbf16>
      %c2 = arith.constant 2 : index
      %c0_45 = arith.constant 0 : index
      %c0_46 = arith.constant 0 : index
      %61 = vector.load %arg13[%c2, %c0_45, %c0_46] : memref<4x16x8xbf16, #tpu.memory_space<vmem>>, vector<1x16x8xbf16>
      %62 = vector.shape_cast %61 : vector<1x16x8xbf16> to vector<16x8xbf16>
      %63 = vector.shape_cast %60 : vector<16x8xbf16> to vector<1x16x8xbf16>
      tpu.vector_store %arg13[%c2, %c0_45, %c0_46], %63 {strides = array<i32>} : memref<4x16x8xbf16, #tpu.memory_space<vmem>>, vector<1x16x8xbf16>,
      %64 = vector.extract_strided_slice %51 {offsets = [0, 24], sizes = [16, 8], strides = [1, 1]} : vector<16x32xbf16> to vector<16x8xbf16>
      %c3 = arith.constant 3 : index
      %c0_47 = arith.constant 0 : index
      %c0_48 = arith.constant 0 : index
      %65 = vector.load %arg13[%c3, %c0_47, %c0_48] : memref<4x16x8xbf16, #tpu.memory_space<vmem>>, vector<1x16x8xbf16>
      %66 = vector.shape_cast %65 : vector<1x16x8xbf16> to vector<16x8xbf16>
      %67 = vector.shape_cast %64 : vector<16x8xbf16> to vector<1x16x8xbf16>
      tpu.vector_store %arg13[%c3, %c0_47, %c0_48], %67 {strides = array<i32>} : memref<4x16x8xbf16, #tpu.memory_space<vmem>>, vector<1x16x8xbf16>,
      %cst_49 = arith.constant 0xFF800000 : f32
      %68 = vector.broadcast %cst_49 : f32 to vector<4x16x1xf32>
      %c0_50 = arith.constant 0 : index
      %c0_51 = arith.constant 0 : index
      %c0_52 = arith.constant 0 : index
      %69 = vector.load %arg14[%c0_50, %c0_51, %c0_52] : memref<4x16x1xf32, #tpu.memory_space<vmem>>, vector<4x16x1xf32>
      tpu.vector_store %arg14[%c0_50, %c0_51, %c0_52], %68 {strides = array<i32>} : memref<4x16x1xf32, #tpu.memory_space<vmem>>, vector<4x16x1xf32>,
      %cst_53 = arith.constant 0.000000e+00 : f32
      %70 = vector.broadcast %cst_53 : f32 to vector<4x16x1xf32>
      %c0_54 = arith.constant 0 : index
      %c0_55 = arith.constant 0 : index
      %c0_56 = arith.constant 0 : index
      %71 = vector.load %arg15[%c0_54, %c0_55, %c0_56] : memref<4x16x1xf32, #tpu.memory_space<vmem>>, vector<4x16x1xf32>
      tpu.vector_store %arg15[%c0_54, %c0_55, %c0_56], %70 {strides = array<i32>} : memref<4x16x1xf32, #tpu.memory_space<vmem>>, vector<4x16x1xf32>,
      %cst_57 = arith.constant 0.000000e+00 : f32
      %72 = vector.broadcast %cst_57 : f32 to vector<4x16x8xf32>
      %c0_58 = arith.constant 0 : index
      %c0_59 = arith.constant 0 : index
      %c0_60 = arith.constant 0 : index
      %73 = vector.load %arg16[%c0_58, %c0_59, %c0_60] : memref<4x16x8xf32, #tpu.memory_space<vmem>>, vector<4x16x8xf32>
      tpu.vector_store %arg16[%c0_58, %c0_59, %c0_60], %72 {strides = array<i32>} : memref<4x16x8xf32, #tpu.memory_space<vmem>>, vector<4x16x8xf32>,
    } else {
    }
    %11 = arith.index_cast %arg2 : i32 to index
    %c0 = arith.constant 0 : index
    %c0_6 = arith.constant 0 : index
    %c0_7 = arith.constant 0 : index
    %12 = vector.load %arg11[%11, %c0, %c0_6, %c0_7] : memref<2x4x32x8xbf16, #tpu.memory_space<vmem>>, vector<1x4x32x8xbf16>
    %13 = vector.shape_cast %12 : vector<1x4x32x8xbf16> to vector<4x32x8xbf16>
    %14 = arith.index_cast %arg2 : i32 to index
    %c0_8 = arith.constant 0 : index
    %c0_9 = arith.constant 0 : index
    %c0_10 = arith.constant 0 : index
    %15 = vector.load %arg12[%14, %c0_8, %c0_9, %c0_10] : memref<2x4x32x8xbf16, #tpu.memory_space<vmem>>, vector<1x4x32x8xbf16>
    %16 = vector.shape_cast %15 : vector<1x4x32x8xbf16> to vector<4x32x8xbf16>
    %c0_11 = arith.constant 0 : index
    %c0_12 = arith.constant 0 : index
    %c0_13 = arith.constant 0 : index
    %17 = vector.load %arg13[%c0_11, %c0_12, %c0_13] : memref<4x16x8xbf16, #tpu.memory_space<vmem>>, vector<4x16x8xbf16>
    %cst = arith.constant dense<0.000000e+00> : vector<4x16x32xf32>
    %18 = tpu.matmul %17, %13, %cst {dimension_numbers = #tpu.dot_dimension_numbers<[2], [2], [1], [1], [0, 0, 0, 1, 1, 1], [0], [0]>} : vector<4x16x8xbf16>, vector<4x32x8xbf16>, vector<4x16x32xf32> -> vector<4x16x32xf32>
    %c0_14 = arith.constant 0 : index
    %c0_15 = arith.constant 0 : index
    %c0_16 = arith.constant 0 : index
    %19 = vector.load %arg14[%c0_14, %c0_15, %c0_16] : memref<4x16x1xf32, #tpu.memory_space<vmem>>, vector<4x16x1xf32>
    %cst_17 = arith.constant dense<0xFF800000> : vector<4x16xf32>
    %20 = vector.multi_reduction <maximumf>, %18, %cst_17 [2] : vector<4x16x32xf32> to vector<4x16xf32>
    %21 = vector.shape_cast %20 : vector<4x16xf32> to vector<4x16x1xf32>
    %22 = arith.maximumf %19, %21 : vector<4x16x1xf32>
    %23 = arith.subf %19, %22 : vector<4x16x1xf32>
    %24 = math.exp %23 : vector<4x16x1xf32>
    %25 = vector.broadcast %22 : vector<4x16x1xf32> to vector<4x16x32xf32>
    %26 = arith.subf %18, %25 : vector<4x16x32xf32>
    %27 = math.exp %26 : vector<4x16x32xf32>
    %c0_18 = arith.constant 0 : index
    %c0_19 = arith.constant 0 : index
    %c0_20 = arith.constant 0 : index
    %28 = vector.load %arg15[%c0_18, %c0_19, %c0_20] : memref<4x16x1xf32, #tpu.memory_space<vmem>>, vector<4x16x1xf32>
    %29 = arith.mulf %24, %28 : vector<4x16x1xf32>
    %cst_21 = arith.constant dense<0.000000e+00> : vector<4x16xf32>
    %30 = vector.multi_reduction <add>, %27, %cst_21 [2] : vector<4x16x32xf32> to vector<4x16xf32>
    %31 = vector.shape_cast %30 : vector<4x16xf32> to vector<4x16x1xf32>
    %32 = arith.addf %29, %31 : vector<4x16x1xf32>
    %c0_22 = arith.constant 0 : index
    %c0_23 = arith.constant 0 : index
    %c0_24 = arith.constant 0 : index
    %33 = vector.load %arg15[%c0_22, %c0_23, %c0_24] : memref<4x16x1xf32, #tpu.memory_space<vmem>>, vector<4x16x1xf32>
    tpu.vector_store %arg15[%c0_22, %c0_23, %c0_24], %32 {strides = array<i32>} : memref<4x16x1xf32, #tpu.memory_space<vmem>>, vector<4x16x1xf32>,
    %c0_25 = arith.constant 0 : index
    %c0_26 = arith.constant 0 : index
    %c0_27 = arith.constant 0 : index
    %34 = vector.load %arg16[%c0_25, %c0_26, %c0_27] : memref<4x16x8xf32, #tpu.memory_space<vmem>>, vector<4x16x8xf32>
    %35 = vector.broadcast %24 : vector<4x16x1xf32> to vector<4x16x8xf32>
    %36 = arith.mulf %35, %34 : vector<4x16x8xf32>
    %37 = arith.truncf %27 : vector<4x16x32xf32> to vector<4x16x32xbf16>
    %cst_28 = arith.constant dense<0.000000e+00> : vector<4x16x8xf32>
    %38 = tpu.matmul %37, %16, %cst_28 {dimension_numbers = #tpu.dot_dimension_numbers<[2], [1], [1], [2], [0, 0, 0, 1, 1, 2], [0], [0]>} : vector<4x16x32xbf16>, vector<4x32x8xbf16>, vector<4x16x8xf32> -> vector<4x16x8xf32>
    %39 = arith.addf %36, %38 : vector<4x16x8xf32>
    %c0_29 = arith.constant 0 : index
    %c0_30 = arith.constant 0 : index
    %c0_31 = arith.constant 0 : index
    %40 = vector.load %arg16[%c0_29, %c0_30, %c0_31] : memref<4x16x8xf32, #tpu.memory_space<vmem>>, vector<4x16x8xf32>
    tpu.vector_store %arg16[%c0_29, %c0_30, %c0_31], %39 {strides = array<i32>} : memref<4x16x8xf32, #tpu.memory_space<vmem>>, vector<4x16x8xf32>,
    %c0_32 = arith.constant 0 : index
    %c0_33 = arith.constant 0 : index
    %c0_34 = arith.constant 0 : index
    %41 = vector.load %arg14[%c0_32, %c0_33, %c0_34] : memref<4x16x1xf32, #tpu.memory_space<vmem>>, vector<4x16x1xf32>
    tpu.vector_store %arg14[%c0_32, %c0_33, %c0_34], %22 {strides = array<i32>} : memref<4x16x1xf32, #tpu.memory_space<vmem>>, vector<4x16x1xf32>,
    %c1_i32 = arith.constant 1 : i32
    %42 = arith.cmpi eq, %arg2, %c1_i32 : i32
    %43 = arith.extui %42 : i1 to i32
    %c0_i32_35 = arith.constant 0 : i32
    %44 = arith.cmpi ne, %43, %c0_i32_35 : i32
    scf.if %44 {
      %c0_36 = arith.constant 0 : index
      %c0_37 = arith.constant 0 : index
      %c0_38 = arith.constant 0 : index
      %45 = vector.load %arg16[%c0_36, %c0_37, %c0_38] : memref<4x16x8xf32, #tpu.memory_space<vmem>>, vector<4x16x8xf32>
      %c0_39 = arith.constant 0 : index
      %c0_40 = arith.constant 0 : index
      %c0_41 = arith.constant 0 : index
      %46 = vector.load %arg15[%c0_39, %c0_40, %c0_41] : memref<4x16x1xf32, #tpu.memory_space<vmem>>, vector<4x16x1xf32>
      %47 = tpu.reciprocal %46 {approx = true} : vector<4x16x1xf32> -> vector<4x16x1xf32>
      %48 = vector.broadcast %47 : vector<4x16x1xf32> to vector<4x16x8xf32>
      %49 = arith.mulf %45, %48 : vector<4x16x8xf32>
      %50 = arith.truncf %49 : vector<4x16x8xf32> to vector<4x16x8xbf16>
      %51 = vector.extract_strided_slice %50 {offsets = [0, 0, 0], sizes = [1, 16, 8], strides = [1, 1, 1]} : vector<4x16x8xbf16> to vector<1x16x8xbf16>
      %52 = vector.shape_cast %51 : vector<1x16x8xbf16> to vector<16x8xbf16>
      %53 = vector.extract_strided_slice %50 {offsets = [1, 0, 0], sizes = [1, 16, 8], strides = [1, 1, 1]} : vector<4x16x8xbf16> to vector<1x16x8xbf16>
      %54 = vector.shape_cast %53 : vector<1x16x8xbf16> to vector<16x8xbf16>
      %55 = vector.extract_strided_slice %50 {offsets = [2, 0, 0], sizes = [1, 16, 8], strides = [1, 1, 1]} : vector<4x16x8xbf16> to vector<1x16x8xbf16>
      %56 = vector.shape_cast %55 : vector<1x16x8xbf16> to vector<16x8xbf16>
      %57 = vector.extract_strided_slice %50 {offsets = [3, 0, 0], sizes = [1, 16, 8], strides = [1, 1, 1]} : vector<4x16x8xbf16> to vector<1x16x8xbf16>
      %58 = vector.shape_cast %57 : vector<1x16x8xbf16> to vector<16x8xbf16>
      %59 = tpu.concatenate %52, %54, %56, %58 in 1 : vector<16x8xbf16>, vector<16x8xbf16>, vector<16x8xbf16>, vector<16x8xbf16> -> vector<16x32xbf16>
      %c0_42 = arith.constant 0 : index
      %c0_43 = arith.constant 0 : index
      %60 = vector.load %arg7[%c0_42, %c0_43] : memref<32x32xbf16, #tpu.memory_space<vmem>>, vector<32x32xbf16>
      %cst_44 = arith.constant dense<0.000000e+00> : vector<16x32xf32>
      %61 = tpu.matmul %59, %60, %cst_44 {dimension_numbers = #tpu.dot_dimension_numbers<[1], [0], [0], [1], [0, 0, 1, 1], [], []>} : vector<16x32xbf16>, vector<32x32xbf16>, vector<16x32xf32> -> vector<16x32xf32>
      %c0_45 = arith.constant 0 : index
      %c0_46 = arith.constant 0 : index
      %c0_47 = arith.constant 0 : index
      %62 = vector.load %arg9[%c0_45, %c0_46, %c0_47] : memref<1x16x32xf32, #tpu.memory_space<vmem>>, vector<1x16x32xf32>
      %63 = vector.shape_cast %62 : vector<1x16x32xf32> to vector<16x32xf32>
      %64 = vector.shape_cast %61 : vector<16x32xf32> to vector<1x16x32xf32>
      tpu.vector_store %arg9[%c0_45, %c0_46, %c0_47], %64 {strides = array<i32>} : memref<1x16x32xf32, #tpu.memory_space<vmem>>, vector<1x16x32xf32>,
    } else {
    }
    return
  }
  func.func @transform_0(%arg0: i32, %arg1: i32, %arg2: i32) -> (i32, i32) {
    %c0_i32 = arith.constant 0 : i32
    %c0_i32_0 = arith.constant 0 : i32
    %c0_i32_1 = arith.constant 0 : i32
    return %c0_i32, %c0_i32_0 : i32, i32
  }
  func.func @transform_1(%arg0: i32, %arg1: i32, %arg2: i32) -> (i32, i32) {
    %c0_i32 = arith.constant 0 : i32
    %c0_i32_0 = arith.constant 0 : i32
    %c0_i32_1 = arith.constant 0 : i32
    return %c0_i32, %c0_i32_0 : i32, i32
  }
  func.func @transform_2(%arg0: i32, %arg1: i32, %arg2: i32) -> (i32, i32) {
    %c0_i32 = arith.constant 0 : i32
    %c0_i32_0 = arith.constant 0 : i32
    %c0_i32_1 = arith.constant 0 : i32
    return %c0_i32, %c0_i32_0 : i32, i32
  }
  func.func @transform_3(%arg0: i32, %arg1: i32, %arg2: i32) -> (i32, i32) {
    %c0_i32 = arith.constant 0 : i32
    %c0_i32_0 = arith.constant 0 : i32
    %c0_i32_1 = arith.constant 0 : i32
    return %c0_i32, %c0_i32_0 : i32, i32
  }
  func.func @transform_4(%arg0: i32, %arg1: i32, %arg2: i32) -> (i32, i32) {
    %c0_i32 = arith.constant 0 : i32
    %c0_i32_0 = arith.constant 0 : i32
    %c0_i32_1 = arith.constant 0 : i32
    return %c0_i32, %c0_i32_0 : i32, i32
  }
  func.func @transform_5(%arg0: i32, %arg1: i32, %arg2: i32) -> (i32, i32, i32) {
    %c0_i32 = arith.constant 0 : i32
    %c0_i32_0 = arith.constant 0 : i32
    %c0_i32_1 = arith.constant 0 : i32
    return %arg0, %c0_i32, %c0_i32_0 : i32, i32, i32
  }
  func.func @transform_6(%arg0: i32, %arg1: i32, %arg2: i32) -> (i32, i32, i32) {
    %c0_i32 = arith.constant 0 : i32
    %c0_i32_0 = arith.constant 0 : i32
    return %arg0, %arg1, %c0_i32 : i32, i32, i32
  }
}

</mosaic_0001>

<llo_original>
// kernel: tpu_custom_call.1
$region0: #{tpu_custom_call.1}
  #allocation0 [shape = 'u32[]', space=smem, size = 0x4, offset = 0x4, fixed_abs, tag = 'smem constant byte address 0x4 - core index']
  #allocation1 [shape = 'u32[144,128]{1,0:T(1,128)}', space=vmem, size = 0x12000, scoped, tag = 'internal scratch']
  #allocation2 [shape = 'bf16[64,32]{1,0:T(8,128)(2,1)}', space=vmem, size = 0x4000, scoped, tag = 'scratch operand']
  #allocation3 [shape = 'bf16[2,4,32,8]{3,2,1,0:T(8,128)(2,1)}', space=vmem, size = 0x10000, scoped, tag = 'scratch operand']
  #allocation4 [shape = 'bf16[2,4,32,8]{3,2,1,0:T(8,128)(2,1)}', space=vmem, size = 0x10000, scoped, tag = 'scratch operand']
  #allocation5 [shape = 'bf16[4,16,8]{2,1,0:T(8,128)(2,1)}', space=vmem, size = 0x4000, scoped, tag = 'scratch operand']
  #allocation6 [shape = 'f32[4,16,1]{2,1,0:T(8,128)}', space=vmem, size = 0x8000, scoped, tag = 'scratch operand']
  #allocation7 [shape = 'f32[4,16,1]{2,1,0:T(8,128)}', space=vmem, size = 0x8000, scoped, tag = 'scratch operand']
  #allocation8 [shape = 'f32[4,16,8]{2,1,0:T(8,128)}', space=vmem, size = 0x8000, scoped, tag = 'scratch operand']
  %s0 = inlined_call_operand.vmem [shape: f32[1,32], index: 0, kind: input, shape index: {}]
  %s1 = inlined_call_operand.vmem [shape: bf16[32,32], index: 1, kind: input, shape index: {}]
  %s2 = inlined_call_operand.vmem [shape: bf16[32,32], index: 2, kind: input, shape index: {}]
  %s3 = inlined_call_operand.vmem [shape: bf16[32,32], index: 3, kind: input, shape index: {}]
  %s4 = inlined_call_operand.vmem [shape: bf16[32,32], index: 4, kind: input, shape index: {}]
  %s5 = inlined_call_operand.vmem [shape: bf16[2,64,32], index: 5, kind: input, shape index: {}]
  %s6 = inlined_call_operand.vmem [shape: f32[2,64,32], index: 6, kind: output, shape index: {}]
  %s7 = sld [smem:[#allocation0]]
  $region73: #{tpu_custom_call.1} parent=0
    _
  %s9 = ssub.s32 1, %s7
  %s10 = scalar_select 0, %s9, %s7
  loop: start=0, step=1, limit=18
  $region2: #{tpu_custom_call.1} parent=0 // loop_pre_header
    _
  $region3: #{tpu_custom_call.1} parent=0 // loop_header
    %s12 = sphi 0, %s16
    %p13 = scmp.ge.s32.totalorder %s12, 18
    %s19 = sphi 0, %s38
    %s20 = sphi 0, %s34
    %s21 = sphi 0, %s30
    %s22 = sphi 0, %s19
    %s23 = sphi 0, %s20
    %s24 = sphi 0, %s21
    %s25 = sphi 0, %s22
    %s26 = sphi 0, %s23
    %s27 = sphi 0, %s24
    %s39 = sphi 0, %s39
    %s41 = sphi 0, %s39
    %s42 = sphi 0, %s41
    %s56 = sphi 0, %s42
    %s60 = sphi 0, %s60
    %s62 = sphi 0, %s60
    %s63 = sphi 0, %s62
    %s77 = sphi 0, %s63
    %s81 = sphi 0, %s81
    %s83 = sphi 0, %s81
    %s84 = sphi 0, %s83
    %s98 = sphi 0, %s84
    %s102 = sphi 0, %s102
    %s104 = sphi 0, %s102
    %s105 = sphi 0, %s104
    %s119 = sphi 0, %s105
    %s123 = sphi 0, %s123
    %s125 = sphi 0, %s123
    %s126 = sphi 0, %s125
    %s140 = sphi 0, %s126
    %s146 = sphi 0, %s148
    %s149 = sphi 0, %s146
    %s150 = sphi 0, %s149
    %s166 = sphi 0, %s150
    %s174 = sphi 0, %s176
    %s177 = sphi 0, %s174
    %s178 = sphi 0, %s177
    %s194 = sphi 0, %s178
  $region4: #{tpu_custom_call.1} parent=0 // loop_header_branch
    %15 = sbr.rel (%p13) target = $region8
  $region5: #{tpu_custom_call.1} parent=0 // loop_body
    %s17 = ssub.s32 %s12, 1
    %s18 = ssub.s32 %s12, 2
    %s28 = sadd.s32 1, %s21
    %p29 = scmp.ge.s32.totalorder %s28, 2
    %s30 = scalar_select %p29, 0, %s28
    %s31 = sadd.s32 1, %s20
    %s32 = scalar_select %p29, %s31, %s20
    %p33 = scmp.ge.s32.totalorder %s32, 4
    %s34 = scalar_select %p33, 0, %s32
    %s35 = sadd.s32 1, %s19
    %s36 = scalar_select %p33, %s35, %s19
    %p37 = scmp.ge.s32.totalorder %s36, 2
    %s38 = scalar_select %p37, 0, %s36
    %s40 = sadd.s32 %s39, 1
    %p43 = scmp.eq.s32.totalorder %s12, 15
    %p44 = scmp.ne.s32.totalorder %s39, %s41
    %p45 = scmp.eq.s32.totalorder %s12, 0
    %p46 = por %p44, %p45
    %p47 = scmp.ne.s32.totalorder %s39, %s41
    %p48 = scmp.eq.s32.totalorder %s17, 15
    %p49 = por %p47, %p48
    %p50 = scmp.ne.s32.totalorder %s41, %s42
    %p51 = scmp.eq.s32.totalorder %s17, 0
    %p52 = por %p50, %p51
    %p53 = scmp.ne.s32.totalorder %s41, %s42
    %p54 = scmp.eq.s32.totalorder %s18, 15
    %p55 = por %p53, %p54
    %p57 = scmp.ne.s32.totalorder %s42, %s56
    %p58 = scmp.eq.s32.totalorder %s18, 0
    %p59 = por %p57, %p58
    %s61 = sadd.s32 %s60, 1
    %p64 = scmp.eq.s32.totalorder %s12, 15
    %p65 = scmp.ne.s32.totalorder %s60, %s62
    %p66 = scmp.eq.s32.totalorder %s12, 0
    %p67 = por %p65, %p66
    %p68 = scmp.ne.s32.totalorder %s60, %s62
    %p69 = scmp.eq.s32.totalorder %s17, 15
    %p70 = por %p68, %p69
    %p71 = scmp.ne.s32.totalorder %s62, %s63
    %p72 = scmp.eq.s32.totalorder %s17, 0
    %p73 = por %p71, %p72
    %p74 = scmp.ne.s32.totalorder %s62, %s63
    %p75 = scmp.eq.s32.totalorder %s18, 15
    %p76 = por %p74, %p75
    %p78 = scmp.ne.s32.totalorder %s63, %s77
    %p79 = scmp.eq.s32.totalorder %s18, 0
    %p80 = por %p78, %p79
    %s82 = sadd.s32 %s81, 1
    %p85 = scmp.eq.s32.totalorder %s12, 15
    %p86 = scmp.ne.s32.totalorder %s81, %s83
    %p87 = scmp.eq.s32.totalorder %s12, 0
    %p88 = por %p86, %p87
    %p89 = scmp.ne.s32.totalorder %s81, %s83
    %p90 = scmp.eq.s32.totalorder %s17, 15
    %p91 = por %p89, %p90
    %p92 = scmp.ne.s32.totalorder %s83, %s84
    %p93 = scmp.eq.s32.totalorder %s17, 0
    %p94 = por %p92, %p93
    %p95 = scmp.ne.s32.totalorder %s83, %s84
    %p96 = scmp.eq.s32.totalorder %s18, 15
    %p97 = por %p95, %p96
    %p99 = scmp.ne.s32.totalorder %s84, %s98
    %p100 = scmp.eq.s32.totalorder %s18, 0
    %p101 = por %p99, %p100
    %s103 = sadd.s32 %s102, 1
    %p106 = scmp.eq.s32.totalorder %s12, 15
    %p107 = scmp.ne.s32.totalorder %s102, %s104
    %p108 = scmp.eq.s32.totalorder %s12, 0
    %p109 = por %p107, %p108
    %p110 = scmp.ne.s32.totalorder %s102, %s104
    %p111 = scmp.eq.s32.totalorder %s17, 15
    %p112 = por %p110, %p111
    %p113 = scmp.ne.s32.totalorder %s104, %s105
    %p114 = scmp.eq.s32.totalorder %s17, 0
    %p115 = por %p113, %p114
    %p116 = scmp.ne.s32.totalorder %s104, %s105
    %p117 = scmp.eq.s32.totalorder %s18, 15
    %p118 = por %p116, %p117
    %p120 = scmp.ne.s32.totalorder %s105, %s119
    %p121 = scmp.eq.s32.totalorder %s18, 0
    %p122 = por %p120, %p121
    %s124 = sadd.s32 %s123, 1
    %p127 = scmp.eq.s32.totalorder %s12, 15
    %p128 = scmp.ne.s32.totalorder %s123, %s125
    %p129 = scmp.eq.s32.totalorder %s12, 0
    %p130 = por %p128, %p129
    %p131 = scmp.ne.s32.totalorder %s123, %s125
    %p132 = scmp.eq.s32.totalorder %s17, 15
    %p133 = por %p131, %p132
    %p134 = scmp.ne.s32.totalorder %s125, %s126
    %p135 = scmp.eq.s32.totalorder %s17, 0
    %p136 = por %p134, %p135
    %p137 = scmp.ne.s32.totalorder %s125, %s126
    %p138 = scmp.eq.s32.totalorder %s18, 15
    %p139 = por %p137, %p138
    %p141 = scmp.ne.s32.totalorder %s126, %s140
    %p142 = scmp.eq.s32.totalorder %s18, 0
    %p143 = por %p141, %p142
    %s144 = ssub.s32 %s19, %s38
    %p145 = scmp.eq.s32.totalorder %s144, 0
    %s147 = sadd.s32 %s146, 1
    %s148 = scalar_select %p145, %s146, %s147
    %p151 = pneg %p145
    %p152 = scmp.eq.s32.totalorder %s12, 15
    %p153 = por %p151, %p152
    %p154 = scmp.ne.s32.totalorder %s146, %s149
    %p155 = scmp.eq.s32.totalorder %s12, 0
    %p156 = por %p154, %p155
    %p157 = scmp.ne.s32.totalorder %s146, %s149
    %p158 = scmp.eq.s32.totalorder %s17, 15
    %p159 = por %p157, %p158
    %p160 = scmp.ne.s32.totalorder %s149, %s150
    %p161 = scmp.eq.s32.totalorder %s17, 0
    %p162 = por %p160, %p161
    %p163 = scmp.ne.s32.totalorder %s149, %s150
    %p164 = scmp.eq.s32.totalorder %s18, 15
    %p165 = por %p163, %p164
    %p167 = scmp.ne.s32.totalorder %s150, %s166
    %p168 = scmp.eq.s32.totalorder %s18, 0
    %p169 = por %p167, %p168
    %s170 = ssub.s32 %s19, %s38
    %s171 = ssub.s32 %s20, %s34
    %s172 = sor.u32 %s170, %s171
    %p173 = scmp.eq.s32.totalorder %s172, 0
    %s175 = sadd.s32 %s174, 1
    %s176 = scalar_select %p173, %s174, %s175
    %p179 = pneg %p173
    %p180 = scmp.eq.s32.totalorder %s12, 15
    %p181 = por %p179, %p180
    %p182 = scmp.ne.s32.totalorder %s174, %s177
    %p183 = scmp.eq.s32.totalorder %s12, 0
    %p184 = por %p182, %p183
    %p185 = scmp.ne.s32.totalorder %s174, %s177
    %p186 = scmp.eq.s32.totalorder %s17, 15
    %p187 = por %p185, %p186
    %p188 = scmp.ne.s32.totalorder %s177, %s178
    %p189 = scmp.eq.s32.totalorder %s17, 0
    %p190 = por %p188, %p189
    %p191 = scmp.ne.s32.totalorder %s177, %s178
    %p192 = scmp.eq.s32.totalorder %s18, 15
    %p193 = por %p191, %p192
    %p195 = scmp.ne.s32.totalorder %s178, %s194
    %p196 = scmp.eq.s32.totalorder %s18, 0
    %p197 = por %p195, %p196
    %p198 = scmp.le.s32.totalorder 1, %s12
    %p199 = scmp.lt.s32.totalorder %s12, 17
    %p200 = pnand %p198, %p199
    %p201 = pneg %p200
    // Predicated region
    $region9: #{tpu_custom_call.1} parent=5 // pred_check
      _
    $region10: #{tpu_custom_call.1} parent=5 // pred_check_branch
      %203 = sbr.rel (%p200) target = $region12
    $region11: #{tpu_custom_call.1} parent=5 // pred_region
      %s204 = ssub.s32 %s12, 1
      // Predicated region
      $region13: #{tpu_custom_call.1} parent=11 // pred_check
        %p205 = pneg %p52
      $region14: #{tpu_custom_call.1} parent=11 // pred_check_branch
        %207 = sbr.rel (%p205) target = $region16
      $region15: #{tpu_custom_call.1} parent=11 // pred_region
        _
      $region16: #{tpu_custom_call.1} parent=11 // pred_fallthru
        _
      // Predicated region
      $region17: #{tpu_custom_call.1} parent=11 // pred_check
        %p208 = pneg %p73
      $region18: #{tpu_custom_call.1} parent=11 // pred_check_branch
        %210 = sbr.rel (%p208) target = $region20
      $region19: #{tpu_custom_call.1} parent=11 // pred_region
        _
      $region20: #{tpu_custom_call.1} parent=11 // pred_fallthru
        _
      // Predicated region
      $region21: #{tpu_custom_call.1} parent=11 // pred_check
        %p211 = pneg %p94
      $region22: #{tpu_custom_call.1} parent=11 // pred_check_branch
        %213 = sbr.rel (%p211) target = $region24
      $region23: #{tpu_custom_call.1} parent=11 // pred_region
        _
      $region24: #{tpu_custom_call.1} parent=11 // pred_fallthru
        _
      // Predicated region
      $region25: #{tpu_custom_call.1} parent=11 // pred_check
        %p214 = pneg %p115
      $region26: #{tpu_custom_call.1} parent=11 // pred_check_branch
        %216 = sbr.rel (%p214) target = $region28
      $region27: #{tpu_custom_call.1} parent=11 // pred_region
        _
      $region28: #{tpu_custom_call.1} parent=11 // pred_fallthru
        _
      // Predicated region
      $region29: #{tpu_custom_call.1} parent=11 // pred_check
        %p217 = pneg %p136
      $region30: #{tpu_custom_call.1} parent=11 // pred_check_branch
        %219 = sbr.rel (%p217) target = $region32
      $region31: #{tpu_custom_call.1} parent=11 // pred_region
        _
      $region32: #{tpu_custom_call.1} parent=11 // pred_fallthru
        _
    $region12: #{tpu_custom_call.1} parent=5 // pred_fallthru
      _
    %p220 = scmp.lt.s32.totalorder %s12, 16
    // Predicated region
    $region33: #{tpu_custom_call.1} parent=5 // pred_check
      %p221 = pneg %p220
    $region34: #{tpu_custom_call.1} parent=5 // pred_check_branch
      %223 = sbr.rel (%p221) target = $region36
    $region35: #{tpu_custom_call.1} parent=5 // pred_region
      // Predicated region
      $region37: #{tpu_custom_call.1} parent=35 // pred_check
        %p224 = pneg %p156
      $region38: #{tpu_custom_call.1} parent=35 // pred_check_branch
        %226 = sbr.rel (%p224) target = $region40
      $region39: #{tpu_custom_call.1} parent=35 // pred_region
        %p227 = scmp.lt.s32.totalorder %s19, 1
        %s228 = scalar_select %p227, %s19, 1
        %s229 = smul.addr %s228, 8
        %s230 = smul.addr %s229, 4
        %s231 = scalar_lea.vmem %s5, %s230
      $region40: #{tpu_custom_call.1} parent=35 // pred_fallthru
        _
    $region36: #{tpu_custom_call.1} parent=5 // pred_fallthru
      _
    %p232 = scmp.le.s32.totalorder 1, %s12
    %p233 = scmp.lt.s32.totalorder %s12, 17
    %p234 = pnand %p232, %p233
    %p235 = pneg %p234
    // Predicated region
    $region41: #{tpu_custom_call.1} parent=5 // pred_check
      _
    $region42: #{tpu_custom_call.1} parent=5 // pred_check_branch
      %237 = sbr.rel (%p234) target = $region44
    $region43: #{tpu_custom_call.1} parent=5 // pred_region
      %s238 = ssub.s32 %s12, 1
      %p239 = pneg %p52
      %p240 = pneg %p49
      %p241 = pneg %p73
      %p242 = pneg %p70
      %p243 = pneg %p94
      %p244 = pneg %p91
      %p245 = pneg %p115
      %p246 = pneg %p112
      %p247 = pneg %p136
      %p248 = pneg %p133
      %p249 = scmp.lt.s32.totalorder %s22, 1
      %s250 = scalar_select %p249, %s22, 1
      %s251 = smul.addr %s250, 8
      %s252 = smul.addr %s251, 4
      %s253 = scalar_lea.vmem %s5, %s252
      %p254 = pneg %p162
      %p255 = pneg %p159
      %p256 = pneg %p190
      %p257 = pneg %p187
      %s258 = smul.u32 2, %s23
      %p259 = scmp.lt.s32.totalorder %s22, 1
      %s260 = scalar_select %p259, %s22, 1
      %p261 = scmp.lt.s32.totalorder %s258, 7
      %s262 = scalar_select %p261, %s258, 7
      %s263 = smul.addr %s260, 8
      %s264 = sadd.s32 %s262, %s263
      %s265 = smul.addr %s264, 8
      %s266 = scalar_lea.vmem %s6, %s265
      %p267 = scmp.lt.s32.totalorder %s22, 1
      %s268 = scalar_select %p267, %s22, 1
      %s269 = smul.addr %s268, 8
      %s270 = smul.addr %s269, 4
      %s271 = scalar_lea.vmem %s5, %s270
      %s272 = smul.u32 2, %s23
      %p273 = scmp.lt.s32.totalorder %s22, 1
      %s274 = scalar_select %p273, %s22, 1
      %p275 = scmp.lt.s32.totalorder %s272, 7
      %s276 = scalar_select %p275, %s272, 7
      %s277 = smul.addr %s274, 8
      %s278 = sadd.s32 %s276, %s277
      %s279 = smul.addr %s278, 8
      %s280 = scalar_lea.vmem %s6, %s279
      %s281 = smul.u32 2, %s23
      %p283 = scmp.eq.s32.totalorder %s23, 0
      %p284 = scmp.eq.s32.totalorder %s24, 0
      %p285 = pnand %p283, %p284
      %p286 = pneg %p285
      // Predicated region
      $region45: #{tpu_custom_call.1} parent=43 // pred_check
        _
      $region46: #{tpu_custom_call.1} parent=43 // pred_check_branch
        %288 = sbr.rel (%p285) target = $region48
      $region47: #{tpu_custom_call.1} parent=43 // pred_region
        %v289 = vld [vmem:[%s271] sm:$0xf]
        %v290 = vld [vmem:[%s271 + $0x4] sm:$0xf]
        %v291 = vld [vmem:[%s271 + $0x8] sm:$0xf]
        %v292 = vld [vmem:[%s271 + $0xc] sm:$0xf]
        %v293 = vld [vmem:[%s271 + $0x10] sm:$0xf]
        %v294 = vld [vmem:[%s271 + $0x14] sm:$0xf]
        %v295 = vld [vmem:[%s271 + $0x18] sm:$0xf]
        %v296 = vld [vmem:[%s271 + $0x1c] sm:$0xf]
        %v297 = vunpack.c.l.bf16 %v289
        %v298 = vunpack.c.l.bf16 %v290
        %v299 = vunpack.c.l.bf16 %v291
        %v300 = vunpack.c.l.bf16 %v292
        %v301 = vunpack.c.l.bf16 %v293
        %v302 = vunpack.c.l.bf16 %v294
        %v303 = vunpack.c.l.bf16 %v295
        %v304 = vunpack.c.l.bf16 %v296
        %v305 = vmul.f32 %v297, %v297
        %v306 = vmul.f32 %v298, %v298
        %v307 = vmul.f32 %v299, %v299
        %v308 = vmul.f32 %v300, %v300
        %v309 = vmul.f32 %v301, %v301
        %v310 = vmul.f32 %v302, %v302
        %v311 = vmul.f32 %v303, %v303
        %v312 = vmul.f32 %v304, %v304
        %vm313 = vcmask 261120
        %v314 = vsel %vm313, %v305, 0.0
        %315 = vadd.xlane.f32.xlu0 %v314
        %v316 = vpop.xlane.xlu0 %315
        %v317 = vsel %vm313, %v306, 0.0
        %318 = vadd.xlane.f32.xlu0 %v317
        %v319 = vpop.xlane.xlu0 %318
        %v320 = vsel %vm313, %v307, 0.0
        %321 = vadd.xlane.f32.xlu0 %v320
        %v322 = vpop.xlane.xlu0 %321
        %v323 = vsel %vm313, %v308, 0.0
        %324 = vadd.xlane.f32.xlu0 %v323
        %v325 = vpop.xlane.xlu0 %324
        %v326 = vsel %vm313, %v309, 0.0
        %327 = vadd.xlane.f32.xlu0 %v326
        %v328 = vpop.xlane.xlu0 %327
        %v329 = vsel %vm313, %v310, 0.0
        %330 = vadd.xlane.f32.xlu0 %v329
        %v331 = vpop.xlane.xlu0 %330
        %v332 = vsel %vm313, %v311, 0.0
        %333 = vadd.xlane.f32.xlu0 %v332
        %v334 = vpop.xlane.xlu0 %333
        %v335 = vsel %vm313, %v312, 0.0
        %336 = vadd.xlane.f32.xlu0 %v335
        %v337 = vpop.xlane.xlu0 %336
        %v338 = vrcp.pop 32.0
        %v339 = vmul.f32 %v316, %v338
        %v340 = vmul.f32 %v319, %v338
        %v341 = vmul.f32 %v322, %v338
        %v342 = vmul.f32 %v325, %v338
        %v343 = vmul.f32 %v328, %v338
        %v344 = vmul.f32 %v331, %v338
        %v345 = vmul.f32 %v334, %v338
        %v346 = vmul.f32 %v337, %v338
        %v347 = vadd.f32 %v339, 1e-05
        %v348 = vadd.f32 %v340, 1e-05
        %v349 = vadd.f32 %v341, 1e-05
        %v350 = vadd.f32 %v342, 1e-05
        %v351 = vadd.f32 %v343, 1e-05
        %v352 = vadd.f32 %v344, 1e-05
        %v353 = vadd.f32 %v345, 1e-05
        %v354 = vadd.f32 %v346, 1e-05
        %v355 = vrsqrt.pop %v347
        %v356 = vrsqrt.pop %v348
        %v357 = vrsqrt.pop %v349
        %v358 = vrsqrt.pop %v350
        %v359 = vrsqrt.pop %v351
        %v360 = vrsqrt.pop %v352
        %v361 = vrsqrt.pop %v353
        %v362 = vrsqrt.pop %v354
        %v363 = vmul.f32 %v297, %v355
        %v364 = vmul.f32 %v298, %v356
        %v365 = vmul.f32 %v299, %v357
        %v366 = vmul.f32 %v300, %v358
        %v367 = vmul.f32 %v301, %v359
        %v368 = vmul.f32 %v302, %v360
        %v369 = vmul.f32 %v303, %v361
        %v370 = vmul.f32 %v304, %v362
        %v371 = vld [vmem:[%s0] sm:$0x1]
        %v373 = vlaneseq
        %v374 = vshrl.u32 %v373, 7
        %v375 = vsub.s32 0, %v374
        %v376 = vrot.slane %v371, %v375
        %v378 = vmul.f32 %v363, %v376
        %v379 = vmul.f32 %v364, %v376
        %v380 = vmul.f32 %v365, %v376
        %v381 = vmul.f32 %v366, %v376
        %v382 = vmul.f32 %v367, %v376
        %v383 = vmul.f32 %v368, %v376
        %v384 = vmul.f32 %v369, %v376
        %v385 = vmul.f32 %v370, %v376
        %v386 = vpack.c.bf16 %v379, %v378
        %v387 = vpack.c.bf16 %v381, %v380
        %v388 = vpack.c.bf16 %v383, %v382
        %v389 = vpack.c.bf16 %v385, %v384
        %v394 = vunpack.c.l.b16 %v386
        %v395 = vunpack.c.h.b16 %v386
        %v396 = vunpack.c.l.b16 %v387
        %v397 = vunpack.c.h.b16 %v387
        %v398 = vunpack.c.l.b16 %v388
        %v399 = vunpack.c.h.b16 %v388
        %v400 = vunpack.c.l.b16 %v389
        %v401 = vunpack.c.h.b16 %v389
        %v402 = vpack.c.b16 %v394, %v394
        %v403 = vpack.c.b16 %v395, %v395
        %v404 = vpack.c.b16 %v396, %v396
        %v405 = vpack.c.b16 %v397, %v397
        %v406 = vpack.c.b16 %v398, %v398
        %v407 = vpack.c.b16 %v399, %v399
        %v408 = vpack.c.b16 %v400, %v400
        %v409 = vpack.c.b16 %v401, %v401
        %vm418 = vcmask 257024
        %419 = vst.msk [vmem:[#allocation2] sm:$0xf] %vm418, %v402
        %420 = vst.msk [vmem:[#allocation2 + $0x4] sm:$0xf] %vm418, %v403
        %421 = vst.msk [vmem:[#allocation2 + $0x8] sm:$0xf] %vm418, %v404
        %422 = vst.msk [vmem:[#allocation2 + $0xc] sm:$0xf] %vm418, %v405
        %423 = vst.msk [vmem:[#allocation2 + $0x10] sm:$0xf] %vm418, %v406
        %424 = vst.msk [vmem:[#allocation2 + $0x14] sm:$0xf] %vm418, %v407
        %425 = vst.msk [vmem:[#allocation2 + $0x18] sm:$0xf] %vm418, %v408
        %426 = vst.msk [vmem:[#allocation2 + $0x1c] sm:$0xf] %vm418, %v409
      $region48: #{tpu_custom_call.1} parent=43 // pred_fallthru
        _
      // Predicated region
      $region49: #{tpu_custom_call.1} parent=43 // pred_check
        %p427 = pneg %p283
      $region50: #{tpu_custom_call.1} parent=43 // pred_check_branch
        %429 = sbr.rel (%p427) target = $region52
      $region51: #{tpu_custom_call.1} parent=43 // pred_region
        %s430 = smul.u32 %s24, 32
        %s431 = sshra.s32 %s430, 3
        %s432 = sand.u32 %s430, 7
        %s433 = smul.addr %s431, 4
        %s434 = scalar_lea.vmem [#allocation2], %s433
        %v435 = vld [vmem:[%s434] sm:$0xf]
        %v436 = vld [vmem:[%s434 + $0x4] sm:$0xf]
        %v437 = vld [vmem:[%s434 + $0x8] sm:$0xf]
        %v438 = vld [vmem:[%s434 + $0xc] sm:$0xf]
        %v439 = vld [vmem:[%s2] sm:$0xf]
        %v440 = vld [vmem:[%s2 + $0x4] sm:$0xf]
        %v441 = vld [vmem:[%s2 + $0x8] sm:$0xf]
        %v442 = vld [vmem:[%s2 + $0xc] sm:$0xf]
        %v447 = vunpack.c.l.b16 %v435
        %v448 = vunpack.c.l.b16 %v436
        %v449 = vunpack.c.l.b16 %v437
        %v450 = vunpack.c.l.b16 %v438
        %v451 = vpack.c.b16 %v448, %v447
        %v452 = vpack.c.b16 %v450, %v449
        %v457 = vunpack.c.l.b16 %v439
        %v458 = vunpack.c.l.b16 %v440
        %v459 = vunpack.c.l.b16 %v441
        %v460 = vunpack.c.l.b16 %v442
        %v461 = vpack.c.b16 %v458, %v457
        %v462 = vpack.c.b16 %v460, %v459
        %vm465 = vcmask 261120
        %v467 = vsel %vm465, %v451, 0
        %v470 = vsel %vm465, %v452, 0
        %472 = vmatprep.subr.bf16.mxu0 0
        %473 = vmatpush1.bf16.msra.mxu0 0
        %474 = vmatprep.subr.bf16.mxu0 0
        %475 = vmatpush1.bf16.msra.mxu0 0
        %476 = vmatprep.subr.bf16.mxu0 0
        %477 = vmatpush1.bf16.msra.mxu0 0
        %478 = vmatprep.subr.bf16.mxu0 0
        %479 = vmatpush1.bf16.msra.mxu0 0
        %480 = vmatprep.subr.bf16.mxu0 0
        %481 = vmatpush1.bf16.msra.mxu0 0
        %482 = vmatprep.subr.bf16.mxu0 0
        %483 = vmatpush1.bf16.msra.mxu0 0
        %484 = vmatprep.subr.bf16.mxu0 0
        %485 = vmatpush1.bf16.msra.mxu0 %v462
        %486 = vmatprep.subr.bf16.mxu0 0
        %487 = vmatpush1.bf16.msra.mxu0 %v461
        %488 = vmatprep.subr.bf16.mxu0 0
        %489 = vmatpush2.bf16.msra.mxu0 0
        %490 = vmatprep.subr.bf16.mxu0 0
        %491 = vmatpush2.bf16.msra.mxu0 0
        %492 = vmatprep.subr.bf16.mxu0 0
        %493 = vmatpush2.bf16.msra.mxu0 0
        %494 = vmatprep.subr.bf16.mxu0 0
        %495 = vmatpush2.bf16.msra.mxu0 0
        %496 = vmatprep.subr.bf16.mxu0 0
        %497 = vmatpush2.bf16.msra.mxu0 0
        %498 = vmatprep.subr.bf16.mxu0 0
        %499 = vmatpush2.bf16.msra.mxu0 0
        %500 = vmatprep.subr.bf16.mxu0 0
        %501 = vmatpush2.bf16.msra.mxu0 0
        %502 = vmatprep.subr.bf16.mxu0 0
        %503 = vmatpush2.bf16.msra.mxu0 0
        %504 = vmatprep.mubr.bf16.mxu0 0
        %505 = vmatmul.mubr.bf16.gmra.mxu0 %v467
        %v506 = vpop.f32.mrf.mxu0
        %v507 = vadd.f32 0.0, %v506
        %v508 = vpop.f32.mrf.mxu0
        %v509 = vpop.f32.mrf.mxu0
        %v510 = vadd.f32 0.0, %v509
        %v511 = vpop.f32.mrf.mxu0
        %512 = vmatprep.mubr.bf16.mxu0 0
        %513 = vmatmul.mubr.bf16.gmra.mxu0 %v470
        %v514 = vpop.f32.mrf.mxu0
        %v515 = vadd.f32 0.0, %v514
        %v516 = vpop.f32.mrf.mxu0
        %v517 = vpop.f32.mrf.mxu0
        %v518 = vadd.f32 0.0, %v517
        %v519 = vpop.f32.mrf.mxu0
        %520 = vdwg.mxu0
        %v521 = vld [vmem:[%s3] sm:$0xf]
        %v522 = vld [vmem:[%s3 + $0x4] sm:$0xf]
        %v523 = vld [vmem:[%s3 + $0x8] sm:$0xf]
        %v524 = vld [vmem:[%s3 + $0xc] sm:$0xf]
        %v529 = vunpack.c.l.b16 %v521
        %v530 = vunpack.c.l.b16 %v522
        %v531 = vunpack.c.l.b16 %v523
        %v532 = vunpack.c.l.b16 %v524
        %v533 = vpack.c.b16 %v530, %v529
        %v534 = vpack.c.b16 %v532, %v531
        %537 = vmatprep.subr.bf16.mxu0 0
        %538 = vmatpush1.bf16.msra.mxu0 0
        %539 = vmatprep.subr.bf16.mxu0 0
        %540 = vmatpush1.bf16.msra.mxu0 0
        %541 = vmatprep.subr.bf16.mxu0 0
        %542 = vmatpush1.bf16.msra.mxu0 0
        %543 = vmatprep.subr.bf16.mxu0 0
        %544 = vmatpush1.bf16.msra.mxu0 0
        %545 = vmatprep.subr.bf16.mxu0 0
        %546 = vmatpush1.bf16.msra.mxu0 0
        %547 = vmatprep.subr.bf16.mxu0 0
        %548 = vmatpush1.bf16.msra.mxu0 0
        %549 = vmatprep.subr.bf16.mxu0 0
        %550 = vmatpush1.bf16.msra.mxu0 %v534
        %551 = vmatprep.subr.bf16.mxu0 0
        %552 = vmatpush1.bf16.msra.mxu0 %v533
        %553 = vmatprep.subr.bf16.mxu0 0
        %554 = vmatpush2.bf16.msra.mxu0 0
        %555 = vmatprep.subr.bf16.mxu0 0
        %556 = vmatpush2.bf16.msra.mxu0 0
        %557 = vmatprep.subr.bf16.mxu0 0
        %558 = vmatpush2.bf16.msra.mxu0 0
        %559 = vmatprep.subr.bf16.mxu0 0
        %560 = vmatpush2.bf16.msra.mxu0 0
        %561 = vmatprep.subr.bf16.mxu0 0
        %562 = vmatpush2.bf16.msra.mxu0 0
        %563 = vmatprep.subr.bf16.mxu0 0
        %564 = vmatpush2.bf16.msra.mxu0 0
        %565 = vmatprep.subr.bf16.mxu0 0
        %566 = vmatpush2.bf16.msra.mxu0 0
        %567 = vmatprep.subr.bf16.mxu0 0
        %568 = vmatpush2.bf16.msra.mxu0 0
        %569 = vmatprep.mubr.bf16.mxu0 0
        %570 = vmatmul.mubr.bf16.gmra.mxu0 %v467
        %v571 = vpop.f32.mrf.mxu0
        %v572 = vadd.f32 0.0, %v571
        %v573 = vpop.f32.mrf.mxu0
        %v574 = vpop.f32.mrf.mxu0
        %v575 = vadd.f32 0.0, %v574
        %v576 = vpop.f32.mrf.mxu0
        %577 = vmatprep.mubr.bf16.mxu0 0
        %578 = vmatmul.mubr.bf16.gmra.mxu0 %v470
        %v579 = vpop.f32.mrf.mxu0
        %v580 = vadd.f32 0.0, %v579
        %v581 = vpop.f32.mrf.mxu0
        %v582 = vpop.f32.mrf.mxu0
        %v583 = vadd.f32 0.0, %v582
        %v584 = vpop.f32.mrf.mxu0
        %585 = vdwg.mxu0
        %v586 = vpack.c.bf16 %v510, %v507
        %v587 = vpack.c.bf16 %v518, %v515
        %v588 = vpack.c.bf16 %v575, %v572
        %v589 = vpack.c.bf16 %v583, %v580
        %v592 = vunpack.c.l.b16 %v586
        %v593 = vunpack.c.h.b16 %v586
        %v594 = vunpack.c.l.b16 %v587
        %v595 = vunpack.c.h.b16 %v587
        %v596 = vpack.c.b16 %v592, %v592
        %v597 = vpack.c.b16 %v593, %v593
        %v598 = vpack.c.b16 %v594, %v594
        %v599 = vpack.c.b16 %v595, %v595
        %s604 = smul.u32 %s24, 16
        %s605 = smul.addr %s604, 4
        %s606 = scalar_lea.vmem [#allocation3], %s605
        %vm607 = vcmask 60416
        %608 = vst.msk [vmem:[%s606] sm:$0xf] %vm607, %v596
        %609 = vst.msk [vmem:[%s606 + $0x4] sm:$0xf] %vm607, %v597
        %610 = vst.msk [vmem:[%s606 + $0x8] sm:$0xf] %vm607, %v598
        %611 = vst.msk [vmem:[%s606 + $0xc] sm:$0xf] %vm607, %v599
        %v614 = vunpack.c.l.b16 %v588
        %v615 = vunpack.c.h.b16 %v588
        %v616 = vunpack.c.l.b16 %v589
        %v617 = vunpack.c.h.b16 %v589
        %v618 = vpack.c.b16 %v614, %v614
        %v619 = vpack.c.b16 %v615, %v615
        %v620 = vpack.c.b16 %v616, %v616
        %v621 = vpack.c.b16 %v617, %v617
        %s626 = smul.addr %s604, 4
        %s627 = scalar_lea.vmem [#allocation4], %s626
        %628 = vst.msk [vmem:[%s627] sm:$0xf] %vm607, %v618
        %629 = vst.msk [vmem:[%s627 + $0x4] sm:$0xf] %vm607, %v619
        %630 = vst.msk [vmem:[%s627 + $0x8] sm:$0xf] %vm607, %v620
        %631 = vst.msk [vmem:[%s627 + $0xc] sm:$0xf] %vm607, %v621
        %632 = vrot.lane.b32.xlu0 %v596, 120
        %v633 = vpop.permute.xlu0 %632
        %634 = vrot.lane.b32.xlu0 %v597, 120
        %v635 = vpop.permute.xlu0 %634
        %636 = vrot.lane.b32.xlu0 %v598, 120
        %v637 = vpop.permute.xlu0 %636
        %638 = vrot.lane.b32.xlu0 %v599, 120
        %v639 = vpop.permute.xlu0 %638
        %s644 = sadd.s32 4, %s604
        %s645 = smul.addr %s644, 4
        %s646 = scalar_lea.vmem [#allocation3], %s645
        %647 = vst.msk [vmem:[%s646] sm:$0xf] %vm607, %v633
        %648 = vst.msk [vmem:[%s646 + $0x4] sm:$0xf] %vm607, %v635
        %649 = vst.msk [vmem:[%s646 + $0x8] sm:$0xf] %vm607, %v637
        %650 = vst.msk [vmem:[%s646 + $0xc] sm:$0xf] %vm607, %v639
        %651 = vrot.lane.b32.xlu0 %v618, 120
        %v652 = vpop.permute.xlu0 %651
        %653 = vrot.lane.b32.xlu0 %v619, 120
        %v654 = vpop.permute.xlu0 %653
        %655 = vrot.lane.b32.xlu0 %v620, 120
        %v656 = vpop.permute.xlu0 %655
        %657 = vrot.lane.b32.xlu0 %v621, 120
        %v658 = vpop.permute.xlu0 %657
        %s663 = smul.addr %s644, 4
        %s664 = scalar_lea.vmem [#allocation4], %s663
        %665 = vst.msk [vmem:[%s664] sm:$0xf] %vm607, %v652
        %666 = vst.msk [vmem:[%s664 + $0x4] sm:$0xf] %vm607, %v654
        %667 = vst.msk [vmem:[%s664 + $0x8] sm:$0xf] %vm607, %v656
        %668 = vst.msk [vmem:[%s664 + $0xc] sm:$0xf] %vm607, %v658
        %669 = vrot.lane.b32.xlu0 %v596, 112
        %v670 = vpop.permute.xlu0 %669
        %671 = vrot.lane.b32.xlu0 %v597, 112
        %v672 = vpop.permute.xlu0 %671
        %673 = vrot.lane.b32.xlu0 %v598, 112
        %v674 = vpop.permute.xlu0 %673
        %675 = vrot.lane.b32.xlu0 %v599, 112
        %v676 = vpop.permute.xlu0 %675
        %s681 = sadd.s32 8, %s604
        %s682 = smul.addr %s681, 4
        %s683 = scalar_lea.vmem [#allocation3], %s682
        %684 = vst.msk [vmem:[%s683] sm:$0xf] %vm607, %v670
        %685 = vst.msk [vmem:[%s683 + $0x4] sm:$0xf] %vm607, %v672
        %686 = vst.msk [vmem:[%s683 + $0x8] sm:$0xf] %vm607, %v674
        %687 = vst.msk [vmem:[%s683 + $0xc] sm:$0xf] %vm607, %v676
        %688 = vrot.lane.b32.xlu0 %v618, 112
        %v689 = vpop.permute.xlu0 %688
        %690 = vrot.lane.b32.xlu0 %v619, 112
        %v691 = vpop.permute.xlu0 %690
        %692 = vrot.lane.b32.xlu0 %v620, 112
        %v693 = vpop.permute.xlu0 %692
        %694 = vrot.lane.b32.xlu0 %v621, 112
        %v695 = vpop.permute.xlu0 %694
        %s700 = smul.addr %s681, 4
        %s701 = scalar_lea.vmem [#allocation4], %s700
        %702 = vst.msk [vmem:[%s701] sm:$0xf] %vm607, %v689
        %703 = vst.msk [vmem:[%s701 + $0x4] sm:$0xf] %vm607, %v691
        %704 = vst.msk [vmem:[%s701 + $0x8] sm:$0xf] %vm607, %v693
        %705 = vst.msk [vmem:[%s701 + $0xc] sm:$0xf] %vm607, %v695
        %706 = vrot.lane.b32.xlu0 %v596, 104
        %v707 = vpop.permute.xlu0 %706
        %708 = vrot.lane.b32.xlu0 %v597, 104
        %v709 = vpop.permute.xlu0 %708
        %710 = vrot.lane.b32.xlu0 %v598, 104
        %v711 = vpop.permute.xlu0 %710
        %712 = vrot.lane.b32.xlu0 %v599, 104
        %v713 = vpop.permute.xlu0 %712
        %s718 = sadd.s32 12, %s604
        %s719 = smul.addr %s718, 4
        %s720 = scalar_lea.vmem [#allocation3], %s719
        %721 = vst.msk [vmem:[%s720] sm:$0xf] %vm607, %v707
        %722 = vst.msk [vmem:[%s720 + $0x4] sm:$0xf] %vm607, %v709
        %723 = vst.msk [vmem:[%s720 + $0x8] sm:$0xf] %vm607, %v711
        %724 = vst.msk [vmem:[%s720 + $0xc] sm:$0xf] %vm607, %v713
        %725 = vrot.lane.b32.xlu0 %v618, 104
        %v726 = vpop.permute.xlu0 %725
        %727 = vrot.lane.b32.xlu0 %v619, 104
        %v728 = vpop.permute.xlu0 %727
        %729 = vrot.lane.b32.xlu0 %v620, 104
        %v730 = vpop.permute.xlu0 %729
        %731 = vrot.lane.b32.xlu0 %v621, 104
        %v732 = vpop.permute.xlu0 %731
        %s737 = smul.addr %s718, 4
        %s738 = scalar_lea.vmem [#allocation4], %s737
        %739 = vst.msk [vmem:[%s738] sm:$0xf] %vm607, %v726
        %740 = vst.msk [vmem:[%s738 + $0x4] sm:$0xf] %vm607, %v728
        %741 = vst.msk [vmem:[%s738 + $0x8] sm:$0xf] %vm607, %v730
        %742 = vst.msk [vmem:[%s738 + $0xc] sm:$0xf] %vm607, %v732
      $region52: #{tpu_custom_call.1} parent=43 // pred_fallthru
        _
      // Predicated region
      $region53: #{tpu_custom_call.1} parent=43 // pred_check
        %p743 = pneg %p284
      $region54: #{tpu_custom_call.1} parent=43 // pred_check_branch
        %745 = sbr.rel (%p743) target = $region56
      $region55: #{tpu_custom_call.1} parent=43 // pred_region
        %s746 = smul.u32 %s23, 16
        %s747 = sshra.s32 %s746, 3
        %s748 = sand.u32 %s746, 7
        %s749 = smul.addr %s747, 4
        %s750 = scalar_lea.vmem [#allocation2], %s749
        %v751 = vld [vmem:[%s750] sm:$0xf]
        %v752 = vld [vmem:[%s750 + $0x4] sm:$0xf]
        %v753 = vld [vmem:[%s1] sm:$0xf]
        %v754 = vld [vmem:[%s1 + $0x4] sm:$0xf]
        %v755 = vld [vmem:[%s1 + $0x8] sm:$0xf]
        %v756 = vld [vmem:[%s1 + $0xc] sm:$0xf]
        %v759 = vunpack.c.l.b16 %v751
        %v760 = vunpack.c.l.b16 %v752
        %v761 = vpack.c.b16 %v760, %v759
        %v766 = vunpack.c.l.b16 %v753
        %v767 = vunpack.c.l.b16 %v754
        %v768 = vunpack.c.l.b16 %v755
        %v769 = vunpack.c.l.b16 %v756
        %v770 = vpack.c.b16 %v767, %v766
        %v771 = vpack.c.b16 %v769, %v768
        %vm774 = vcmask 261120
        %v776 = vsel %vm774, %v761, 0
        %778 = vmatprep.subr.bf16.mxu0 0
        %779 = vmatpush1.bf16.msra.mxu0 0
        %780 = vmatprep.subr.bf16.mxu0 0
        %781 = vmatpush1.bf16.msra.mxu0 0
        %782 = vmatprep.subr.bf16.mxu0 0
        %783 = vmatpush1.bf16.msra.mxu0 0
        %784 = vmatprep.subr.bf16.mxu0 0
        %785 = vmatpush1.bf16.msra.mxu0 0
        %786 = vmatprep.subr.bf16.mxu0 0
        %787 = vmatpush1.bf16.msra.mxu0 0
        %788 = vmatprep.subr.bf16.mxu0 0
        %789 = vmatpush1.bf16.msra.mxu0 0
        %790 = vmatprep.subr.bf16.mxu0 0
        %791 = vmatpush1.bf16.msra.mxu0 %v771
        %792 = vmatprep.subr.bf16.mxu0 0
        %793 = vmatpush1.bf16.msra.mxu0 %v770
        %794 = vmatprep.subr.bf16.mxu0 0
        %795 = vmatpush2.bf16.msra.mxu0 0
        %796 = vmatprep.subr.bf16.mxu0 0
        %797 = vmatpush2.bf16.msra.mxu0 0
        %798 = vmatprep.subr.bf16.mxu0 0
        %799 = vmatpush2.bf16.msra.mxu0 0
        %800 = vmatprep.subr.bf16.mxu0 0
        %801 = vmatpush2.bf16.msra.mxu0 0
        %802 = vmatprep.subr.bf16.mxu0 0
        %803 = vmatpush2.bf16.msra.mxu0 0
        %804 = vmatprep.subr.bf16.mxu0 0
        %805 = vmatpush2.bf16.msra.mxu0 0
        %806 = vmatprep.subr.bf16.mxu0 0
        %807 = vmatpush2.bf16.msra.mxu0 0
        %808 = vmatprep.subr.bf16.mxu0 0
        %809 = vmatpush2.bf16.msra.mxu0 0
        %810 = vmatprep.mubr.bf16.mxu0 0
        %811 = vmatmul.mubr.bf16.gmra.mxu0 %v776
        %v812 = vpop.f32.mrf.mxu0
        %v813 = vadd.f32 0.0, %v812
        %v814 = vpop.f32.mrf.mxu0
        %v815 = vpop.f32.mrf.mxu0
        %v816 = vadd.f32 0.0, %v815
        %v817 = vpop.f32.mrf.mxu0
        %818 = vdwg.mxu0
        %v819 = vpack.c.bf16 %v816, %v813
        %v821 = vunpack.c.l.b16 %v819
        %v822 = vunpack.c.h.b16 %v819
        %v823 = vpack.c.b16 %v821, %v821
        %v824 = vpack.c.b16 %v822, %v822
        %vm827 = vcmask 60416
        %828 = vst.msk [vmem:[#allocation5] sm:$0xf] %vm827, %v823
        %829 = vst.msk [vmem:[#allocation5 + $0x4] sm:$0xf] %vm827, %v824
        %830 = vrot.lane.b32.xlu0 %v823, 120
        %v831 = vpop.permute.xlu0 %830
        %832 = vrot.lane.b32.xlu0 %v824, 120
        %v833 = vpop.permute.xlu0 %832
        %s836 = scalar_lea.vmem [#allocation5], 8
        %837 = vst.msk [vmem:[%s836] sm:$0xf] %vm827, %v831
        %838 = vst.msk [vmem:[%s836 + $0x4] sm:$0xf] %vm827, %v833
        %839 = vrot.lane.b32.xlu0 %v823, 112
        %v840 = vpop.permute.xlu0 %839
        %841 = vrot.lane.b32.xlu0 %v824, 112
        %v842 = vpop.permute.xlu0 %841
        %s845 = scalar_lea.vmem [#allocation5], 16
        %846 = vst.msk [vmem:[%s845] sm:$0xf] %vm827, %v840
        %847 = vst.msk [vmem:[%s845 + $0x4] sm:$0xf] %vm827, %v842
        %848 = vrot.lane.b32.xlu0 %v823, 104
        %v849 = vpop.permute.xlu0 %848
        %850 = vrot.lane.b32.xlu0 %v824, 104
        %v851 = vpop.permute.xlu0 %850
        %s854 = scalar_lea.vmem [#allocation5], 24
        %855 = vst.msk [vmem:[%s854] sm:$0xf] %vm827, %v849
        %856 = vst.msk [vmem:[%s854 + $0x4] sm:$0xf] %vm827, %v851
        %vm857 = vcmask 7168
        %858 = vst.msk [vmem:[#allocation6] sm:$0xff] %vm857, -inf
        %859 = vst.msk [vmem:[#allocation6 + $0x8] sm:$0xff] %vm857, -inf
        %860 = vst.msk [vmem:[#allocation6 + $0x10] sm:$0xff] %vm857, -inf
        %861 = vst.msk [vmem:[#allocation6 + $0x18] sm:$0xff] %vm857, -inf
        %862 = vst.msk [vmem:[#allocation6 + $0x20] sm:$0xff] %vm857, -inf
        %863 = vst.msk [vmem:[#allocation6 + $0x28] sm:$0xff] %vm857, -inf
        %864 = vst.msk [vmem:[#allocation6 + $0x30] sm:$0xff] %vm857, -inf
        %865 = vst.msk [vmem:[#allocation6 + $0x38] sm:$0xff] %vm857, -inf
        %866 = vst.msk [vmem:[#allocation7] sm:$0xff] %vm857, 0.0
        %867 = vst.msk [vmem:[#allocation7 + $0x8] sm:$0xff] %vm857, 0.0
        %868 = vst.msk [vmem:[#allocation7 + $0x10] sm:$0xff] %vm857, 0.0
        %869 = vst.msk [vmem:[#allocation7 + $0x18] sm:$0xff] %vm857, 0.0
        %870 = vst.msk [vmem:[#allocation7 + $0x20] sm:$0xff] %vm857, 0.0
        %871 = vst.msk [vmem:[#allocation7 + $0x28] sm:$0xff] %vm857, 0.0
        %872 = vst.msk [vmem:[#allocation7 + $0x30] sm:$0xff] %vm857, 0.0
        %873 = vst.msk [vmem:[#allocation7 + $0x38] sm:$0xff] %vm857, 0.0
        %vm874 = vcmask 64512
        %875 = vst.msk [vmem:[#allocation8] sm:$0xff] %vm874, 0.0
        %876 = vst.msk [vmem:[#allocation8 + $0x8] sm:$0xff] %vm874, 0.0
        %877 = vst.msk [vmem:[#allocation8 + $0x10] sm:$0xff] %vm874, 0.0
        %878 = vst.msk [vmem:[#allocation8 + $0x18] sm:$0xff] %vm874, 0.0
        %879 = vst.msk [vmem:[#allocation8 + $0x20] sm:$0xff] %vm874, 0.0
        %880 = vst.msk [vmem:[#allocation8 + $0x28] sm:$0xff] %vm874, 0.0
        %881 = vst.msk [vmem:[#allocation8 + $0x30] sm:$0xff] %vm874, 0.0
        %882 = vst.msk [vmem:[#allocation8 + $0x38] sm:$0xff] %vm874, 0.0
      $region56: #{tpu_custom_call.1} parent=43 // pred_fallthru
        _
      %s883 = smul.u32 %s24, 16
      %s884 = smul.addr %s883, 4
      %s885 = scalar_lea.vmem [#allocation3], %s884
      %v886 = vld [vmem:[%s885] sm:$0xf]
      %v887 = vld [vmem:[%s885 + $0x4] sm:$0xf]
      %v888 = vld [vmem:[%s885 + $0x8] sm:$0xf]
      %v889 = vld [vmem:[%s885 + $0xc] sm:$0xf]
      %v890 = vld [vmem:[%s885 + $0x10] sm:$0xf]
      %v891 = vld [vmem:[%s885 + $0x14] sm:$0xf]
      %v892 = vld [vmem:[%s885 + $0x18] sm:$0xf]
      %v893 = vld [vmem:[%s885 + $0x1c] sm:$0xf]
      %v894 = vld [vmem:[%s885 + $0x20] sm:$0xf]
      %v895 = vld [vmem:[%s885 + $0x24] sm:$0xf]
      %v896 = vld [vmem:[%s885 + $0x28] sm:$0xf]
      %v897 = vld [vmem:[%s885 + $0x2c] sm:$0xf]
      %v898 = vld [vmem:[%s885 + $0x30] sm:$0xf]
      %v899 = vld [vmem:[%s885 + $0x34] sm:$0xf]
      %v900 = vld [vmem:[%s885 + $0x38] sm:$0xf]
      %v901 = vld [vmem:[%s885 + $0x3c] sm:$0xf]
      %s902 = smul.addr %s883, 4
      %s903 = scalar_lea.vmem [#allocation4], %s902
      %v904 = vld [vmem:[%s903] sm:$0xf]
      %v905 = vld [vmem:[%s903 + $0x4] sm:$0xf]
      %v906 = vld [vmem:[%s903 + $0x8] sm:$0xf]
      %v907 = vld [vmem:[%s903 + $0xc] sm:$0xf]
      %v908 = vld [vmem:[%s903 + $0x10] sm:$0xf]
      %v909 = vld [vmem:[%s903 + $0x14] sm:$0xf]
      %v910 = vld [vmem:[%s903 + $0x18] sm:$0xf]
      %v911 = vld [vmem:[%s903 + $0x1c] sm:$0xf]
      %v912 = vld [vmem:[%s903 + $0x20] sm:$0xf]
      %v913 = vld [vmem:[%s903 + $0x24] sm:$0xf]
      %v914 = vld [vmem:[%s903 + $0x28] sm:$0xf]
      %v915 = vld [vmem:[%s903 + $0x2c] sm:$0xf]
      %v916 = vld [vmem:[%s903 + $0x30] sm:$0xf]
      %v917 = vld [vmem:[%s903 + $0x34] sm:$0xf]
      %v918 = vld [vmem:[%s903 + $0x38] sm:$0xf]
      %v919 = vld [vmem:[%s903 + $0x3c] sm:$0xf]
      %v920 = vld [vmem:[#allocation5] sm:$0xf]
      %v921 = vld [vmem:[#allocation5 + $0x4] sm:$0xf]
      %v922 = vld [vmem:[#allocation5 + $0x8] sm:$0xf]
      %v923 = vld [vmem:[#allocation5 + $0xc] sm:$0xf]
      %v924 = vld [vmem:[#allocation5 + $0x10] sm:$0xf]
      %v925 = vld [vmem:[#allocation5 + $0x14] sm:$0xf]
      %v926 = vld [vmem:[#allocation5 + $0x18] sm:$0xf]
      %v927 = vld [vmem:[#allocation5 + $0x1c] sm:$0xf]
      %v930 = vunpack.c.l.b16 %v920
      %v931 = vunpack.c.l.b16 %v921
      %v932 = vpack.c.b16 %v931, %v930
      %v937 = vunpack.c.l.b16 %v886
      %v938 = vunpack.c.l.b16 %v887
      %v939 = vunpack.c.l.b16 %v888
      %v940 = vunpack.c.l.b16 %v889
      %v941 = vpack.c.b16 %v938, %v937
      %v942 = vpack.c.b16 %v940, %v939
      %vm943 = vcmask 64512
      %v945 = vsel %vm943, %v932, 0
      %v948 = vsel %vm943, %v941, 0
      %v951 = vsel %vm943, %v942, 0
      %953 = vmatprep.subr.bf16.mxu0 0
      %954 = vmatpush1.bf16.xpose.msra.mxu0 0
      %955 = vmatprep.subr.bf16.mxu0 0
      %956 = vmatpush1.bf16.xpose.msra.mxu0 0
      %957 = vmatprep.subr.bf16.mxu0 0
      %958 = vmatpush1.bf16.xpose.msra.mxu0 0
      %959 = vmatprep.subr.bf16.mxu0 0
      %960 = vmatpush1.bf16.xpose.msra.mxu0 0
      %961 = vmatprep.subr.bf16.mxu0 0
      %962 = vmatpush1.bf16.xpose.msra.mxu0 0
      %963 = vmatprep.subr.bf16.mxu0 0
      %964 = vmatpush1.bf16.xpose.msra.mxu0 0
      %965 = vmatprep.subr.bf16.mxu0 0
      %966 = vmatpush1.bf16.xpose.msra.mxu0 %v951
      %967 = vmatprep.subr.bf16.mxu0 0
      %968 = vmatpush1.bf16.xpose.msra.mxu0 %v948
      %969 = vmatprep.subr.bf16.mxu0 0
      %970 = vmatpush2.bf16.xpose.msra.mxu0 0
      %971 = vmatprep.subr.bf16.mxu0 0
      %972 = vmatpush2.bf16.xpose.msra.mxu0 0
      %973 = vmatprep.subr.bf16.mxu0 0
      %974 = vmatpush2.bf16.xpose.msra.mxu0 0
      %975 = vmatprep.subr.bf16.mxu0 0
      %976 = vmatpush2.bf16.xpose.msra.mxu0 0
      %977 = vmatprep.subr.bf16.mxu0 0
      %978 = vmatpush2.bf16.xpose.msra.mxu0 0
      %979 = vmatprep.subr.bf16.mxu0 0
      %980 = vmatpush2.bf16.xpose.msra.mxu0 0
      %981 = vmatprep.subr.bf16.mxu0 0
      %982 = vmatpush2.bf16.xpose.msra.mxu0 0
      %983 = vmatprep.subr.bf16.mxu0 0
      %984 = vmatpush2.bf16.xpose.msra.mxu0 0
      %985 = vmatprep.mubr.bf16.mxu0 0
      %986 = vmatmul.mubr.bf16.gmra.mxu0 %v945
      %v987 = vpop.f32.mrf.mxu0
      %v988 = vadd.f32 0.0, %v987
      %v989 = vpop.f32.mrf.mxu0
      %v990 = vpop.f32.mrf.mxu0
      %v991 = vadd.f32 0.0, %v990
      %v992 = vpop.f32.mrf.mxu0
      %993 = vdwg.mxu0
      %v996 = vunpack.c.l.b16 %v922
      %v997 = vunpack.c.l.b16 %v923
      %v998 = vpack.c.b16 %v997, %v996
      %v1003 = vunpack.c.l.b16 %v890
      %v1004 = vunpack.c.l.b16 %v891
      %v1005 = vunpack.c.l.b16 %v892
      %v1006 = vunpack.c.l.b16 %v893
      %v1007 = vpack.c.b16 %v1004, %v1003
      %v1008 = vpack.c.b16 %v1006, %v1005
      %v1010 = vsel %vm943, %v998, 0
      %v1013 = vsel %vm943, %v1007, 0
      %v1016 = vsel %vm943, %v1008, 0
      %1018 = vmatprep.subr.bf16.mxu0 0
      %1019 = vmatpush1.bf16.xpose.msra.mxu0 0
      %1020 = vmatprep.subr.bf16.mxu0 0
      %1021 = vmatpush1.bf16.xpose.msra.mxu0 0
      %1022 = vmatprep.subr.bf16.mxu0 0
      %1023 = vmatpush1.bf16.xpose.msra.mxu0 0
      %1024 = vmatprep.subr.bf16.mxu0 0
      %1025 = vmatpush1.bf16.xpose.msra.mxu0 0
      %1026 = vmatprep.subr.bf16.mxu0 0
      %1027 = vmatpush1.bf16.xpose.msra.mxu0 0
      %1028 = vmatprep.subr.bf16.mxu0 0
      %1029 = vmatpush1.bf16.xpose.msra.mxu0 0
      %1030 = vmatprep.subr.bf16.mxu0 0
      %1031 = vmatpush1.bf16.xpose.msra.mxu0 %v1016
      %1032 = vmatprep.subr.bf16.mxu0 0
      %1033 = vmatpush1.bf16.xpose.msra.mxu0 %v1013
      %1034 = vmatprep.subr.bf16.mxu0 0
      %1035 = vmatpush2.bf16.xpose.msra.mxu0 0
      %1036 = vmatprep.subr.bf16.mxu0 0
      %1037 = vmatpush2.bf16.xpose.msra.mxu0 0
      %1038 = vmatprep.subr.bf16.mxu0 0
      %1039 = vmatpush2.bf16.xpose.msra.mxu0 0
      %1040 = vmatprep.subr.bf16.mxu0 0
      %1041 = vmatpush2.bf16.xpose.msra.mxu0 0
      %1042 = vmatprep.subr.bf16.mxu0 0
      %1043 = vmatpush2.bf16.xpose.msra.mxu0 0
      %1044 = vmatprep.subr.bf16.mxu0 0
      %1045 = vmatpush2.bf16.xpose.msra.mxu0 0
      %1046 = vmatprep.subr.bf16.mxu0 0
      %1047 = vmatpush2.bf16.xpose.msra.mxu0 0
      %1048 = vmatprep.subr.bf16.mxu0 0
      %1049 = vmatpush2.bf16.xpose.msra.mxu0 0
      %1050 = vmatprep.mubr.bf16.mxu0 0
      %1051 = vmatmul.mubr.bf16.gmra.mxu0 %v1010
      %v1052 = vpop.f32.mrf.mxu0
      %v1053 = vadd.f32 0.0, %v1052
      %v1054 = vpop.f32.mrf.mxu0
      %v1055 = vpop.f32.mrf.mxu0
      %v1056 = vadd.f32 0.0, %v1055
      %v1057 = vpop.f32.mrf.mxu0
      %1058 = vdwg.mxu0
      %v1061 = vunpack.c.l.b16 %v924
      %v1062 = vunpack.c.l.b16 %v925
      %v1063 = vpack.c.b16 %v1062, %v1061
      %v1068 = vunpack.c.l.b16 %v894
      %v1069 = vunpack.c.l.b16 %v895
      %v1070 = vunpack.c.l.b16 %v896
      %v1071 = vunpack.c.l.b16 %v897
      %v1072 = vpack.c.b16 %v1069, %v1068
      %v1073 = vpack.c.b16 %v1071, %v1070
      %v1075 = vsel %vm943, %v1063, 0
      %v1078 = vsel %vm943, %v1072, 0
      %v1081 = vsel %vm943, %v1073, 0
      %1083 = vmatprep.subr.bf16.mxu0 0
      %1084 = vmatpush1.bf16.xpose.msra.mxu0 0
      %1085 = vmatprep.subr.bf16.mxu0 0
      %1086 = vmatpush1.bf16.xpose.msra.mxu0 0
      %1087 = vmatprep.subr.bf16.mxu0 0
      %1088 = vmatpush1.bf16.xpose.msra.mxu0 0
      %1089 = vmatprep.subr.bf16.mxu0 0
      %1090 = vmatpush1.bf16.xpose.msra.mxu0 0
      %1091 = vmatprep.subr.bf16.mxu0 0
      %1092 = vmatpush1.bf16.xpose.msra.mxu0 0
      %1093 = vmatprep.subr.bf16.mxu0 0
      %1094 = vmatpush1.bf16.xpose.msra.mxu0 0
      %1095 = vmatprep.subr.bf16.mxu0 0
      %1096 = vmatpush1.bf16.xpose.msra.mxu0 %v1081
      %1097 = vmatprep.subr.bf16.mxu0 0
      %1098 = vmatpush1.bf16.xpose.msra.mxu0 %v1078
      %1099 = vmatprep.subr.bf16.mxu0 0
      %1100 = vmatpush2.bf16.xpose.msra.mxu0 0
      %1101 = vmatprep.subr.bf16.mxu0 0
      %1102 = vmatpush2.bf16.xpose.msra.mxu0 0
      %1103 = vmatprep.subr.bf16.mxu0 0
      %1104 = vmatpush2.bf16.xpose.msra.mxu0 0
      %1105 = vmatprep.subr.bf16.mxu0 0
      %1106 = vmatpush2.bf16.xpose.msra.mxu0 0
      %1107 = vmatprep.subr.bf16.mxu0 0
      %1108 = vmatpush2.bf16.xpose.msra.mxu0 0
      %1109 = vmatprep.subr.bf16.mxu0 0
      %1110 = vmatpush2.bf16.xpose.msra.mxu0 0
      %1111 = vmatprep.subr.bf16.mxu0 0
      %1112 = vmatpush2.bf16.xpose.msra.mxu0 0
      %1113 = vmatprep.subr.bf16.mxu0 0
      %1114 = vmatpush2.bf16.xpose.msra.mxu0 0
      %1115 = vmatprep.mubr.bf16.mxu0 0
      %1116 = vmatmul.mubr.bf16.gmra.mxu0 %v1075
      %v1117 = vpop.f32.mrf.mxu0
      %v1118 = vadd.f32 0.0, %v1117
      %v1119 = vpop.f32.mrf.mxu0
      %v1120 = vpop.f32.mrf.mxu0
      %v1121 = vadd.f32 0.0, %v1120
      %v1122 = vpop.f32.mrf.mxu0
      %1123 = vdwg.mxu0
      %v1126 = vunpack.c.l.b16 %v926
      %v1127 = vunpack.c.l.b16 %v927
      %v1128 = vpack.c.b16 %v1127, %v1126
      %v1133 = vunpack.c.l.b16 %v898
      %v1134 = vunpack.c.l.b16 %v899
      %v1135 = vunpack.c.l.b16 %v900
      %v1136 = vunpack.c.l.b16 %v901
      %v1137 = vpack.c.b16 %v1134, %v1133
      %v1138 = vpack.c.b16 %v1136, %v1135
      %v1140 = vsel %vm943, %v1128, 0
      %v1143 = vsel %vm943, %v1137, 0
      %v1146 = vsel %vm943, %v1138, 0
      %1148 = vmatprep.subr.bf16.mxu0 0
      %1149 = vmatpush1.bf16.xpose.msra.mxu0 0
      %1150 = vmatprep.subr.bf16.mxu0 0
      %1151 = vmatpush1.bf16.xpose.msra.mxu0 0
      %1152 = vmatprep.subr.bf16.mxu0 0
      %1153 = vmatpush1.bf16.xpose.msra.mxu0 0
      %1154 = vmatprep.subr.bf16.mxu0 0
      %1155 = vmatpush1.bf16.xpose.msra.mxu0 0
      %1156 = vmatprep.subr.bf16.mxu0 0
      %1157 = vmatpush1.bf16.xpose.msra.mxu0 0
      %1158 = vmatprep.subr.bf16.mxu0 0
      %1159 = vmatpush1.bf16.xpose.msra.mxu0 0
      %1160 = vmatprep.subr.bf16.mxu0 0
      %1161 = vmatpush1.bf16.xpose.msra.mxu0 %v1146
      %1162 = vmatprep.subr.bf16.mxu0 0
      %1163 = vmatpush1.bf16.xpose.msra.mxu0 %v1143
      %1164 = vmatprep.subr.bf16.mxu0 0
      %1165 = vmatpush2.bf16.xpose.msra.mxu0 0
      %1166 = vmatprep.subr.bf16.mxu0 0
      %1167 = vmatpush2.bf16.xpose.msra.mxu0 0
      %1168 = vmatprep.subr.bf16.mxu0 0
      %1169 = vmatpush2.bf16.xpose.msra.mxu0 0
      %1170 = vmatprep.subr.bf16.mxu0 0
      %1171 = vmatpush2.bf16.xpose.msra.mxu0 0
      %1172 = vmatprep.subr.bf16.mxu0 0
      %1173 = vmatpush2.bf16.xpose.msra.mxu0 0
      %1174 = vmatprep.subr.bf16.mxu0 0
      %1175 = vmatpush2.bf16.xpose.msra.mxu0 0
      %1176 = vmatprep.subr.bf16.mxu0 0
      %1177 = vmatpush2.bf16.xpose.msra.mxu0 0
      %1178 = vmatprep.subr.bf16.mxu0 0
      %1179 = vmatpush2.bf16.xpose.msra.mxu0 0
      %1180 = vmatprep.mubr.bf16.mxu0 0
      %1181 = vmatmul.mubr.bf16.gmra.mxu0 %v1140
      %v1182 = vpop.f32.mrf.mxu0
      %v1183 = vadd.f32 0.0, %v1182
      %v1184 = vpop.f32.mrf.mxu0
      %v1185 = vpop.f32.mrf.mxu0
      %v1186 = vadd.f32 0.0, %v1185
      %v1187 = vpop.f32.mrf.mxu0
      %1188 = vdwg.mxu0
      %v1189 = vld [vmem:[#allocation6] sm:$0xff]
      %v1190 = vld [vmem:[#allocation6 + $0x8] sm:$0xff]
      %v1191 = vld [vmem:[#allocation6 + $0x10] sm:$0xff]
      %v1192 = vld [vmem:[#allocation6 + $0x18] sm:$0xff]
      %v1193 = vld [vmem:[#allocation6 + $0x20] sm:$0xff]
      %v1194 = vld [vmem:[#allocation6 + $0x28] sm:$0xff]
      %v1195 = vld [vmem:[#allocation6 + $0x30] sm:$0xff]
      %v1196 = vld [vmem:[#allocation6 + $0x38] sm:$0xff]
      %vm1197 = vcmask 261120
      %v1198 = vsel %vm1197, %v988, -inf
      %1199 = vmax.xlane.f32.xlu0 %v1198
      %v1200 = vpop.xlane.xlu0 %1199
      %v1201 = vsel %vm1197, %v991, -inf
      %1202 = vmax.xlane.f32.xlu0 %v1201
      %v1203 = vpop.xlane.xlu0 %1202
      %v1204 = vsel %vm1197, %v1053, -inf
      %1205 = vmax.xlane.f32.xlu0 %v1204
      %v1206 = vpop.xlane.xlu0 %1205
      %v1207 = vsel %vm1197, %v1056, -inf
      %1208 = vmax.xlane.f32.xlu0 %v1207
      %v1209 = vpop.xlane.xlu0 %1208
      %v1210 = vsel %vm1197, %v1118, -inf
      %1211 = vmax.xlane.f32.xlu0 %v1210
      %v1212 = vpop.xlane.xlu0 %1211
      %v1213 = vsel %vm1197, %v1121, -inf
      %1214 = vmax.xlane.f32.xlu0 %v1213
      %v1215 = vpop.xlane.xlu0 %1214
      %v1216 = vsel %vm1197, %v1183, -inf
      %1217 = vmax.xlane.f32.xlu0 %v1216
      %v1218 = vpop.xlane.xlu0 %1217
      %v1219 = vsel %vm1197, %v1186, -inf
      %1220 = vmax.xlane.f32.xlu0 %v1219
      %v1221 = vpop.xlane.xlu0 %1220
      %v1222 = vmax.f32 %v1189, %v1200
      %v1223 = vmax.f32 %v1190, %v1203
      %v1224 = vmax.f32 %v1191, %v1206
      %v1225 = vmax.f32 %v1192, %v1209
      %v1226 = vmax.f32 %v1193, %v1212
      %v1227 = vmax.f32 %v1194, %v1215
      %v1228 = vmax.f32 %v1195, %v1218
      %v1229 = vmax.f32 %v1196, %v1221
      %v1230 = vsub.f32 %v1189, %v1222
      %v1231 = vsub.f32 %v1190, %v1223
      %v1232 = vsub.f32 %v1191, %v1224
      %v1233 = vsub.f32 %v1192, %v1225
      %v1234 = vsub.f32 %v1193, %v1226
      %v1235 = vsub.f32 %v1194, %v1227
      %v1236 = vsub.f32 %v1195, %v1228
      %v1237 = vsub.f32 %v1196, %v1229
      %v1238 = vmul.f32 %v1230, 1.442695
      %v1239 = vpow.pop %v1238
      %v1240 = vmul.f32 %v1231, 1.442695
      %v1241 = vpow.pop %v1240
      %v1242 = vmul.f32 %v1232, 1.442695
      %v1243 = vpow.pop %v1242
      %v1244 = vmul.f32 %v1233, 1.442695
      %v1245 = vpow.pop %v1244
      %v1246 = vmul.f32 %v1234, 1.442695
      %v1247 = vpow.pop %v1246
      %v1248 = vmul.f32 %v1235, 1.442695
      %v1249 = vpow.pop %v1248
      %v1250 = vmul.f32 %v1236, 1.442695
      %v1251 = vpow.pop %v1250
      %v1252 = vmul.f32 %v1237, 1.442695
      %v1253 = vpow.pop %v1252
      %1255 = vset.pattern.permute.xlu0 0
      %1256 = vperm.xlu0 %1255, %v1222
      %v1257 = vpop.permute.xlu0 %1256
      %1260 = vset.pattern.permute.xlu0 0
      %1261 = vperm.xlu0 %1260, %v1223
      %v1262 = vpop.permute.xlu0 %1261
      %1265 = vset.pattern.permute.xlu0 0
      %1266 = vperm.xlu0 %1265, %v1224
      %v1267 = vpop.permute.xlu0 %1266
      %1270 = vset.pattern.permute.xlu0 0
      %1271 = vperm.xlu0 %1270, %v1225
      %v1272 = vpop.permute.xlu0 %1271
      %1275 = vset.pattern.permute.xlu0 0
      %1276 = vperm.xlu0 %1275, %v1226
      %v1277 = vpop.permute.xlu0 %1276
      %1280 = vset.pattern.permute.xlu0 0
      %1281 = vperm.xlu0 %1280, %v1227
      %v1282 = vpop.permute.xlu0 %1281
      %1285 = vset.pattern.permute.xlu0 0
      %1286 = vperm.xlu0 %1285, %v1228
      %v1287 = vpop.permute.xlu0 %1286
      %1290 = vset.pattern.permute.xlu0 0
      %1291 = vperm.xlu0 %1290, %v1229
      %v1292 = vpop.permute.xlu0 %1291
      %v1294 = vsub.f32 %v988, %v1257
      %v1295 = vsub.f32 %v991, %v1262
      %v1296 = vsub.f32 %v1053, %v1267
      %v1297 = vsub.f32 %v1056, %v1272
      %v1298 = vsub.f32 %v1118, %v1277
      %v1299 = vsub.f32 %v1121, %v1282
      %v1300 = vsub.f32 %v1183, %v1287
      %v1301 = vsub.f32 %v1186, %v1292
      %v1302 = vmul.f32 %v1294, 1.442695
      %v1303 = vpow.pop %v1302
      %v1304 = vmul.f32 %v1295, 1.442695
      %v1305 = vpow.pop %v1304
      %v1306 = vmul.f32 %v1296, 1.442695
      %v1307 = vpow.pop %v1306
      %v1308 = vmul.f32 %v1297, 1.442695
      %v1309 = vpow.pop %v1308
      %v1310 = vmul.f32 %v1298, 1.442695
      %v1311 = vpow.pop %v1310
      %v1312 = vmul.f32 %v1299, 1.442695
      %v1313 = vpow.pop %v1312
      %v1314 = vmul.f32 %v1300, 1.442695
      %v1315 = vpow.pop %v1314
      %v1316 = vmul.f32 %v1301, 1.442695
      %v1317 = vpow.pop %v1316
      %v1318 = vld [vmem:[#allocation7] sm:$0xff]
      %v1319 = vld [vmem:[#allocation7 + $0x8] sm:$0xff]
      %v1320 = vld [vmem:[#allocation7 + $0x10] sm:$0xff]
      %v1321 = vld [vmem:[#allocation7 + $0x18] sm:$0xff]
      %v1322 = vld [vmem:[#allocation7 + $0x20] sm:$0xff]
      %v1323 = vld [vmem:[#allocation7 + $0x28] sm:$0xff]
      %v1324 = vld [vmem:[#allocation7 + $0x30] sm:$0xff]
      %v1325 = vld [vmem:[#allocation7 + $0x38] sm:$0xff]
      %v1326 = vmul.f32 %v1239, %v1318
      %v1327 = vmul.f32 %v1241, %v1319
      %v1328 = vmul.f32 %v1243, %v1320
      %v1329 = vmul.f32 %v1245, %v1321
      %v1330 = vmul.f32 %v1247, %v1322
      %v1331 = vmul.f32 %v1249, %v1323
      %v1332 = vmul.f32 %v1251, %v1324
      %v1333 = vmul.f32 %v1253, %v1325
      %v1334 = vsel %vm1197, %v1303, 0.0
      %1335 = vadd.xlane.f32.xlu0 %v1334
      %v1336 = vpop.xlane.xlu0 %1335
      %v1337 = vsel %vm1197, %v1305, 0.0
      %1338 = vadd.xlane.f32.xlu0 %v1337
      %v1339 = vpop.xlane.xlu0 %1338
      %v1340 = vsel %vm1197, %v1307, 0.0
      %1341 = vadd.xlane.f32.xlu0 %v1340
      %v1342 = vpop.xlane.xlu0 %1341
      %v1343 = vsel %vm1197, %v1309, 0.0
      %1344 = vadd.xlane.f32.xlu0 %v1343
      %v1345 = vpop.xlane.xlu0 %1344
      %v1346 = vsel %vm1197, %v1311, 0.0
      %1347 = vadd.xlane.f32.xlu0 %v1346
      %v1348 = vpop.xlane.xlu0 %1347
      %v1349 = vsel %vm1197, %v1313, 0.0
      %1350 = vadd.xlane.f32.xlu0 %v1349
      %v1351 = vpop.xlane.xlu0 %1350
      %v1352 = vsel %vm1197, %v1315, 0.0
      %1353 = vadd.xlane.f32.xlu0 %v1352
      %v1354 = vpop.xlane.xlu0 %1353
      %v1355 = vsel %vm1197, %v1317, 0.0
      %1356 = vadd.xlane.f32.xlu0 %v1355
      %v1357 = vpop.xlane.xlu0 %1356
      %v1358 = vadd.f32 %v1326, %v1336
      %v1359 = vadd.f32 %v1327, %v1339
      %v1360 = vadd.f32 %v1328, %v1342
      %v1361 = vadd.f32 %v1329, %v1345
      %v1362 = vadd.f32 %v1330, %v1348
      %v1363 = vadd.f32 %v1331, %v1351
      %v1364 = vadd.f32 %v1332, %v1354
      %v1365 = vadd.f32 %v1333, %v1357
      %vm1366 = vcmask 7168
      %1367 = vst.msk [vmem:[#allocation7] sm:$0xff] %vm1366, %v1358
      %1368 = vst.msk [vmem:[#allocation7 + $0x8] sm:$0xff] %vm1366, %v1359
      %1369 = vst.msk [vmem:[#allocation7 + $0x10] sm:$0xff] %vm1366, %v1360
      %1370 = vst.msk [vmem:[#allocation7 + $0x18] sm:$0xff] %vm1366, %v1361
      %1371 = vst.msk [vmem:[#allocation7 + $0x20] sm:$0xff] %vm1366, %v1362
      %1372 = vst.msk [vmem:[#allocation7 + $0x28] sm:$0xff] %vm1366, %v1363
      %1373 = vst.msk [vmem:[#allocation7 + $0x30] sm:$0xff] %vm1366, %v1364
      %1374 = vst.msk [vmem:[#allocation7 + $0x38] sm:$0xff] %vm1366, %v1365
      %v1375 = vld [vmem:[#allocation8] sm:$0xff]
      %v1376 = vld [vmem:[#allocation8 + $0x8] sm:$0xff]
      %v1377 = vld [vmem:[#allocation8 + $0x10] sm:$0xff]
      %v1378 = vld [vmem:[#allocation8 + $0x18] sm:$0xff]
      %v1379 = vld [vmem:[#allocation8 + $0x20] sm:$0xff]
      %v1380 = vld [vmem:[#allocation8 + $0x28] sm:$0xff]
      %v1381 = vld [vmem:[#allocation8 + $0x30] sm:$0xff]
      %v1382 = vld [vmem:[#allocation8 + $0x38] sm:$0xff]
      %1384 = vset.pattern.permute.xlu0 0
      %1385 = vperm.xlu0 %1384, %v1239
      %v1386 = vpop.permute.xlu0 %1385
      %1389 = vset.pattern.permute.xlu0 0
      %1390 = vperm.xlu0 %1389, %v1241
      %v1391 = vpop.permute.xlu0 %1390
      %1394 = vset.pattern.permute.xlu0 0
      %1395 = vperm.xlu0 %1394, %v1243
      %v1396 = vpop.permute.xlu0 %1395
      %1399 = vset.pattern.permute.xlu0 0
      %1400 = vperm.xlu0 %1399, %v1245
      %v1401 = vpop.permute.xlu0 %1400
      %1404 = vset.pattern.permute.xlu0 0
      %1405 = vperm.xlu0 %1404, %v1247
      %v1406 = vpop.permute.xlu0 %1405
      %1409 = vset.pattern.permute.xlu0 0
      %1410 = vperm.xlu0 %1409, %v1249
      %v1411 = vpop.permute.xlu0 %1410
      %1414 = vset.pattern.permute.xlu0 0
      %1415 = vperm.xlu0 %1414, %v1251
      %v1416 = vpop.permute.xlu0 %1415
      %1419 = vset.pattern.permute.xlu0 0
      %1420 = vperm.xlu0 %1419, %v1253
      %v1421 = vpop.permute.xlu0 %1420
      %v1423 = vmul.f32 %v1386, %v1375
      %v1424 = vmul.f32 %v1391, %v1376
      %v1425 = vmul.f32 %v1396, %v1377
      %v1426 = vmul.f32 %v1401, %v1378
      %v1427 = vmul.f32 %v1406, %v1379
      %v1428 = vmul.f32 %v1411, %v1380
      %v1429 = vmul.f32 %v1416, %v1381
      %v1430 = vmul.f32 %v1421, %v1382
      %v1431 = vpack.c.bf16 %v1305, %v1303
      %v1432 = vpack.c.bf16 %v1309, %v1307
      %v1433 = vpack.c.bf16 %v1313, %v1311
      %v1434 = vpack.c.bf16 %v1317, %v1315
      %v1439 = vunpack.c.l.b16 %v904
      %v1440 = vunpack.c.l.b16 %v905
      %v1441 = vunpack.c.l.b16 %v906
      %v1442 = vunpack.c.l.b16 %v907
      %v1443 = vpack.c.b16 %v1440, %v1439
      %v1444 = vpack.c.b16 %v1442, %v1441
      %v1448 = vsel %vm1197, %v1431, 0
      %1450 = vmatprep.subr.bf16.mxu0 0
      %1451 = vmatpush1.bf16.msra.mxu0 0
      %1452 = vmatprep.subr.bf16.mxu0 0
      %1453 = vmatpush1.bf16.msra.mxu0 0
      %1454 = vmatprep.subr.bf16.mxu0 0
      %1455 = vmatpush1.bf16.msra.mxu0 0
      %1456 = vmatprep.subr.bf16.mxu0 0
      %1457 = vmatpush1.bf16.msra.mxu0 0
      %1458 = vmatprep.subr.bf16.mxu0 0
      %1459 = vmatpush1.bf16.msra.mxu0 0
      %1460 = vmatprep.subr.bf16.mxu0 0
      %1461 = vmatpush1.bf16.msra.mxu0 0
      %1462 = vmatprep.subr.bf16.mxu0 0
      %1463 = vmatpush1.bf16.msra.mxu0 %v1444
      %1464 = vmatprep.subr.bf16.mxu0 0
      %1465 = vmatpush1.bf16.msra.mxu0 %v1443
      %1466 = vmatprep.subr.bf16.mxu0 0
      %1467 = vmatpush2.bf16.msra.mxu0 0
      %1468 = vmatprep.subr.bf16.mxu0 0
      %1469 = vmatpush2.bf16.msra.mxu0 0
      %1470 = vmatprep.subr.bf16.mxu0 0
      %1471 = vmatpush2.bf16.msra.mxu0 0
      %1472 = vmatprep.subr.bf16.mxu0 0
      %1473 = vmatpush2.bf16.msra.mxu0 0
      %1474 = vmatprep.subr.bf16.mxu0 0
      %1475 = vmatpush2.bf16.msra.mxu0 0
      %1476 = vmatprep.subr.bf16.mxu0 0
      %1477 = vmatpush2.bf16.msra.mxu0 0
      %1478 = vmatprep.subr.bf16.mxu0 0
      %1479 = vmatpush2.bf16.msra.mxu0 0
      %1480 = vmatprep.subr.bf16.mxu0 0
      %1481 = vmatpush2.bf16.msra.mxu0 0
      %1482 = vmatprep.mubr.bf16.mxu0 0
      %1483 = vmatmul.mubr.bf16.gmra.mxu0 %v1448
      %v1484 = vpop.f32.mrf.mxu0
      %v1485 = vadd.f32 0.0, %v1484
      %v1486 = vpop.f32.mrf.mxu0
      %v1487 = vpop.f32.mrf.mxu0
      %v1488 = vadd.f32 0.0, %v1487
      %v1489 = vpop.f32.mrf.mxu0
      %1490 = vdwg.mxu0
      %v1495 = vunpack.c.l.b16 %v908
      %v1496 = vunpack.c.l.b16 %v909
      %v1497 = vunpack.c.l.b16 %v910
      %v1498 = vunpack.c.l.b16 %v911
      %v1499 = vpack.c.b16 %v1496, %v1495
      %v1500 = vpack.c.b16 %v1498, %v1497
      %v1504 = vsel %vm1197, %v1432, 0
      %1506 = vmatprep.subr.bf16.mxu0 0
      %1507 = vmatpush1.bf16.msra.mxu0 0
      %1508 = vmatprep.subr.bf16.mxu0 0
      %1509 = vmatpush1.bf16.msra.mxu0 0
      %1510 = vmatprep.subr.bf16.mxu0 0
      %1511 = vmatpush1.bf16.msra.mxu0 0
      %1512 = vmatprep.subr.bf16.mxu0 0
      %1513 = vmatpush1.bf16.msra.mxu0 0
      %1514 = vmatprep.subr.bf16.mxu0 0
      %1515 = vmatpush1.bf16.msra.mxu0 0
      %1516 = vmatprep.subr.bf16.mxu0 0
      %1517 = vmatpush1.bf16.msra.mxu0 0
      %1518 = vmatprep.subr.bf16.mxu0 0
      %1519 = vmatpush1.bf16.msra.mxu0 %v1500
      %1520 = vmatprep.subr.bf16.mxu0 0
      %1521 = vmatpush1.bf16.msra.mxu0 %v1499
      %1522 = vmatprep.subr.bf16.mxu0 0
      %1523 = vmatpush2.bf16.msra.mxu0 0
      %1524 = vmatprep.subr.bf16.mxu0 0
      %1525 = vmatpush2.bf16.msra.mxu0 0
      %1526 = vmatprep.subr.bf16.mxu0 0
      %1527 = vmatpush2.bf16.msra.mxu0 0
      %1528 = vmatprep.subr.bf16.mxu0 0
      %1529 = vmatpush2.bf16.msra.mxu0 0
      %1530 = vmatprep.subr.bf16.mxu0 0
      %1531 = vmatpush2.bf16.msra.mxu0 0
      %1532 = vmatprep.subr.bf16.mxu0 0
      %1533 = vmatpush2.bf16.msra.mxu0 0
      %1534 = vmatprep.subr.bf16.mxu0 0
      %1535 = vmatpush2.bf16.msra.mxu0 0
      %1536 = vmatprep.subr.bf16.mxu0 0
      %1537 = vmatpush2.bf16.msra.mxu0 0
      %1538 = vmatprep.mubr.bf16.mxu0 0
      %1539 = vmatmul.mubr.bf16.gmra.mxu0 %v1504
      %v1540 = vpop.f32.mrf.mxu0
      %v1541 = vadd.f32 0.0, %v1540
      %v1542 = vpop.f32.mrf.mxu0
      %v1543 = vpop.f32.mrf.mxu0
      %v1544 = vadd.f32 0.0, %v1543
      %v1545 = vpop.f32.mrf.mxu0
      %1546 = vdwg.mxu0
      %v1551 = vunpack.c.l.b16 %v912
      %v1552 = vunpack.c.l.b16 %v913
      %v1553 = vunpack.c.l.b16 %v914
      %v1554 = vunpack.c.l.b16 %v915
      %v1555 = vpack.c.b16 %v1552, %v1551
      %v1556 = vpack.c.b16 %v1554, %v1553
      %v1560 = vsel %vm1197, %v1433, 0
      %1562 = vmatprep.subr.bf16.mxu0 0
      %1563 = vmatpush1.bf16.msra.mxu0 0
      %1564 = vmatprep.subr.bf16.mxu0 0
      %1565 = vmatpush1.bf16.msra.mxu0 0
      %1566 = vmatprep.subr.bf16.mxu0 0
      %1567 = vmatpush1.bf16.msra.mxu0 0
      %1568 = vmatprep.subr.bf16.mxu0 0
      %1569 = vmatpush1.bf16.msra.mxu0 0
      %1570 = vmatprep.subr.bf16.mxu0 0
      %1571 = vmatpush1.bf16.msra.mxu0 0
      %1572 = vmatprep.subr.bf16.mxu0 0
      %1573 = vmatpush1.bf16.msra.mxu0 0
      %1574 = vmatprep.subr.bf16.mxu0 0
      %1575 = vmatpush1.bf16.msra.mxu0 %v1556
      %1576 = vmatprep.subr.bf16.mxu0 0
      %1577 = vmatpush1.bf16.msra.mxu0 %v1555
      %1578 = vmatprep.subr.bf16.mxu0 0
      %1579 = vmatpush2.bf16.msra.mxu0 0
      %1580 = vmatprep.subr.bf16.mxu0 0
      %1581 = vmatpush2.bf16.msra.mxu0 0
      %1582 = vmatprep.subr.bf16.mxu0 0
      %1583 = vmatpush2.bf16.msra.mxu0 0
      %1584 = vmatprep.subr.bf16.mxu0 0
      %1585 = vmatpush2.bf16.msra.mxu0 0
      %1586 = vmatprep.subr.bf16.mxu0 0
      %1587 = vmatpush2.bf16.msra.mxu0 0
      %1588 = vmatprep.subr.bf16.mxu0 0
      %1589 = vmatpush2.bf16.msra.mxu0 0
      %1590 = vmatprep.subr.bf16.mxu0 0
      %1591 = vmatpush2.bf16.msra.mxu0 0
      %1592 = vmatprep.subr.bf16.mxu0 0
      %1593 = vmatpush2.bf16.msra.mxu0 0
      %1594 = vmatprep.mubr.bf16.mxu0 0
      %1595 = vmatmul.mubr.bf16.gmra.mxu0 %v1560
      %v1596 = vpop.f32.mrf.mxu0
      %v1597 = vadd.f32 0.0, %v1596
      %v1598 = vpop.f32.mrf.mxu0
      %v1599 = vpop.f32.mrf.mxu0
      %v1600 = vadd.f32 0.0, %v1599
      %v1601 = vpop.f32.mrf.mxu0
      %1602 = vdwg.mxu0
      %v1607 = vunpack.c.l.b16 %v916
      %v1608 = vunpack.c.l.b16 %v917
      %v1609 = vunpack.c.l.b16 %v918
      %v1610 = vunpack.c.l.b16 %v919
      %v1611 = vpack.c.b16 %v1608, %v1607
      %v1612 = vpack.c.b16 %v1610, %v1609
      %v1616 = vsel %vm1197, %v1434, 0
      %1618 = vmatprep.subr.bf16.mxu0 0
      %1619 = vmatpush1.bf16.msra.mxu0 0
      %1620 = vmatprep.subr.bf16.mxu0 0
      %1621 = vmatpush1.bf16.msra.mxu0 0
      %1622 = vmatprep.subr.bf16.mxu0 0
      %1623 = vmatpush1.bf16.msra.mxu0 0
      %1624 = vmatprep.subr.bf16.mxu0 0
      %1625 = vmatpush1.bf16.msra.mxu0 0
      %1626 = vmatprep.subr.bf16.mxu0 0
      %1627 = vmatpush1.bf16.msra.mxu0 0
      %1628 = vmatprep.subr.bf16.mxu0 0
      %1629 = vmatpush1.bf16.msra.mxu0 0
      %1630 = vmatprep.subr.bf16.mxu0 0
      %1631 = vmatpush1.bf16.msra.mxu0 %v1612
      %1632 = vmatprep.subr.bf16.mxu0 0
      %1633 = vmatpush1.bf16.msra.mxu0 %v1611
      %1634 = vmatprep.subr.bf16.mxu0 0
      %1635 = vmatpush2.bf16.msra.mxu0 0
      %1636 = vmatprep.subr.bf16.mxu0 0
      %1637 = vmatpush2.bf16.msra.mxu0 0
      %1638 = vmatprep.subr.bf16.mxu0 0
      %1639 = vmatpush2.bf16.msra.mxu0 0
      %1640 = vmatprep.subr.bf16.mxu0 0
      %1641 = vmatpush2.bf16.msra.mxu0 0
      %1642 = vmatprep.subr.bf16.mxu0 0
      %1643 = vmatpush2.bf16.msra.mxu0 0
      %1644 = vmatprep.subr.bf16.mxu0 0
      %1645 = vmatpush2.bf16.msra.mxu0 0
      %1646 = vmatprep.subr.bf16.mxu0 0
      %1647 = vmatpush2.bf16.msra.mxu0 0
      %1648 = vmatprep.subr.bf16.mxu0 0
      %1649 = vmatpush2.bf16.msra.mxu0 0
      %1650 = vmatprep.mubr.bf16.mxu0 0
      %1651 = vmatmul.mubr.bf16.gmra.mxu0 %v1616
      %v1652 = vpop.f32.mrf.mxu0
      %v1653 = vadd.f32 0.0, %v1652
      %v1654 = vpop.f32.mrf.mxu0
      %v1655 = vpop.f32.mrf.mxu0
      %v1656 = vadd.f32 0.0, %v1655
      %v1657 = vpop.f32.mrf.mxu0
      %1658 = vdwg.mxu0
      %v1659 = vadd.f32 %v1423, %v1485
      %v1660 = vadd.f32 %v1424, %v1488
      %v1661 = vadd.f32 %v1425, %v1541
      %v1662 = vadd.f32 %v1426, %v1544
      %v1663 = vadd.f32 %v1427, %v1597
      %v1664 = vadd.f32 %v1428, %v1600
      %v1665 = vadd.f32 %v1429, %v1653
      %v1666 = vadd.f32 %v1430, %v1656
      %1667 = vst.msk [vmem:[#allocation8] sm:$0xff] %vm943, %v1659
      %1668 = vst.msk [vmem:[#allocation8 + $0x8] sm:$0xff] %vm943, %v1660
      %1669 = vst.msk [vmem:[#allocation8 + $0x10] sm:$0xff] %vm943, %v1661
      %1670 = vst.msk [vmem:[#allocation8 + $0x18] sm:$0xff] %vm943, %v1662
      %1671 = vst.msk [vmem:[#allocation8 + $0x20] sm:$0xff] %vm943, %v1663
      %1672 = vst.msk [vmem:[#allocation8 + $0x28] sm:$0xff] %vm943, %v1664
      %1673 = vst.msk [vmem:[#allocation8 + $0x30] sm:$0xff] %vm943, %v1665
      %1674 = vst.msk [vmem:[#allocation8 + $0x38] sm:$0xff] %vm943, %v1666
      %1675 = vst.msk [vmem:[#allocation6] sm:$0xff] %vm1366, %v1222
      %1676 = vst.msk [vmem:[#allocation6 + $0x8] sm:$0xff] %vm1366, %v1223
      %1677 = vst.msk [vmem:[#allocation6 + $0x10] sm:$0xff] %vm1366, %v1224
      %1678 = vst.msk [vmem:[#allocation6 + $0x18] sm:$0xff] %vm1366, %v1225
      %1679 = vst.msk [vmem:[#allocation6 + $0x20] sm:$0xff] %vm1366, %v1226
      %1680 = vst.msk [vmem:[#allocation6 + $0x28] sm:$0xff] %vm1366, %v1227
      %1681 = vst.msk [vmem:[#allocation6 + $0x30] sm:$0xff] %vm1366, %v1228
      %1682 = vst.msk [vmem:[#allocation6 + $0x38] sm:$0xff] %vm1366, %v1229
      %p1683 = scmp.eq.s32.totalorder %s24, 1
      // Predicated region
      $region57: #{tpu_custom_call.1} parent=43 // pred_check
        %p1684 = pneg %p1683
      $region58: #{tpu_custom_call.1} parent=43 // pred_check_branch
        %1686 = sbr.rel (%p1684) target = $region60
      $region59: #{tpu_custom_call.1} parent=43 // pred_region
        %v1687 = vld [vmem:[#allocation8] sm:$0xff]
        %v1688 = vld [vmem:[#allocation8 + $0x8] sm:$0xff]
        %v1689 = vld [vmem:[#allocation8 + $0x10] sm:$0xff]
        %v1690 = vld [vmem:[#allocation8 + $0x18] sm:$0xff]
        %v1691 = vld [vmem:[#allocation8 + $0x20] sm:$0xff]
        %v1692 = vld [vmem:[#allocation8 + $0x28] sm:$0xff]
        %v1693 = vld [vmem:[#allocation8 + $0x30] sm:$0xff]
        %v1694 = vld [vmem:[#allocation8 + $0x38] sm:$0xff]
        %v1695 = vld [vmem:[#allocation7] sm:$0xff]
        %v1696 = vld [vmem:[#allocation7 + $0x8] sm:$0xff]
        %v1697 = vld [vmem:[#allocation7 + $0x10] sm:$0xff]
        %v1698 = vld [vmem:[#allocation7 + $0x18] sm:$0xff]
        %v1699 = vld [vmem:[#allocation7 + $0x20] sm:$0xff]
        %v1700 = vld [vmem:[#allocation7 + $0x28] sm:$0xff]
        %v1701 = vld [vmem:[#allocation7 + $0x30] sm:$0xff]
        %v1702 = vld [vmem:[#allocation7 + $0x38] sm:$0xff]
        %v1703 = vrcp.pop %v1695
        %v1704 = vrcp.pop %v1696
        %v1705 = vrcp.pop %v1697
        %v1706 = vrcp.pop %v1698
        %v1707 = vrcp.pop %v1699
        %v1708 = vrcp.pop %v1700
        %v1709 = vrcp.pop %v1701
        %v1710 = vrcp.pop %v1702
        %1712 = vset.pattern.permute.xlu0 0
        %1713 = vperm.xlu0 %1712, %v1703
        %v1714 = vpop.permute.xlu0 %1713
        %1717 = vset.pattern.permute.xlu0 0
        %1718 = vperm.xlu0 %1717, %v1704
        %v1719 = vpop.permute.xlu0 %1718
        %1722 = vset.pattern.permute.xlu0 0
        %1723 = vperm.xlu0 %1722, %v1705
        %v1724 = vpop.permute.xlu0 %1723
        %1727 = vset.pattern.permute.xlu0 0
        %1728 = vperm.xlu0 %1727, %v1706
        %v1729 = vpop.permute.xlu0 %1728
        %1732 = vset.pattern.permute.xlu0 0
        %1733 = vperm.xlu0 %1732, %v1707
        %v1734 = vpop.permute.xlu0 %1733
        %1737 = vset.pattern.permute.xlu0 0
        %1738 = vperm.xlu0 %1737, %v1708
        %v1739 = vpop.permute.xlu0 %1738
        %1742 = vset.pattern.permute.xlu0 0
        %1743 = vperm.xlu0 %1742, %v1709
        %v1744 = vpop.permute.xlu0 %1743
        %1747 = vset.pattern.permute.xlu0 0
        %1748 = vperm.xlu0 %1747, %v1710
        %v1749 = vpop.permute.xlu0 %1748
        %v1751 = vmul.f32 %v1687, %v1714
        %v1752 = vmul.f32 %v1688, %v1719
        %v1753 = vmul.f32 %v1689, %v1724
        %v1754 = vmul.f32 %v1690, %v1729
        %v1755 = vmul.f32 %v1691, %v1734
        %v1756 = vmul.f32 %v1692, %v1739
        %v1757 = vmul.f32 %v1693, %v1744
        %v1758 = vmul.f32 %v1694, %v1749
        %v1759 = vpack.c.bf16 %v1752, %v1751
        %v1760 = vpack.c.bf16 %v1754, %v1753
        %v1761 = vpack.c.bf16 %v1756, %v1755
        %v1762 = vpack.c.bf16 %v1758, %v1757
        %1764 = vrot.lane.b32.xlu0 %v1760, 8
        %v1765 = vpop.permute.xlu0 %1764
        %1767 = vrot.lane.b32.xlu0 %v1761, 16
        %v1768 = vpop.permute.xlu0 %1767
        %1770 = vrot.lane.b32.xlu0 %v1762, 24
        %v1771 = vpop.permute.xlu0 %1770
        %v1774 = vsel %vm943, %v1759, %v1765
        %vm1775 = vcmask 130048
        %v1777 = vsel %vm1775, %v1774, %v1768
        %vm1778 = vcmask 195584
        %v1780 = vsel %vm1778, %v1777, %v1771
        %v1781 = vld [vmem:[%s4] sm:$0xf]
        %v1782 = vld [vmem:[%s4 + $0x4] sm:$0xf]
        %v1783 = vld [vmem:[%s4 + $0x8] sm:$0xf]
        %v1784 = vld [vmem:[%s4 + $0xc] sm:$0xf]
        %v1789 = vunpack.c.l.b16 %v1781
        %v1790 = vunpack.c.l.b16 %v1782
        %v1791 = vunpack.c.l.b16 %v1783
        %v1792 = vunpack.c.l.b16 %v1784
        %v1793 = vpack.c.b16 %v1790, %v1789
        %v1794 = vpack.c.b16 %v1792, %v1791
        %v1797 = vsel %vm1197, %v1780, 0
        %1799 = vmatprep.subr.bf16.mxu0 0
        %1800 = vmatpush1.bf16.msra.mxu0 0
        %1801 = vmatprep.subr.bf16.mxu0 0
        %1802 = vmatpush1.bf16.msra.mxu0 0
        %1803 = vmatprep.subr.bf16.mxu0 0
        %1804 = vmatpush1.bf16.msra.mxu0 0
        %1805 = vmatprep.subr.bf16.mxu0 0
        %1806 = vmatpush1.bf16.msra.mxu0 0
        %1807 = vmatprep.subr.bf16.mxu0 0
        %1808 = vmatpush1.bf16.msra.mxu0 0
        %1809 = vmatprep.subr.bf16.mxu0 0
        %1810 = vmatpush1.bf16.msra.mxu0 0
        %1811 = vmatprep.subr.bf16.mxu0 0
        %1812 = vmatpush1.bf16.msra.mxu0 %v1794
        %1813 = vmatprep.subr.bf16.mxu0 0
        %1814 = vmatpush1.bf16.msra.mxu0 %v1793
        %1815 = vmatprep.subr.bf16.mxu0 0
        %1816 = vmatpush2.bf16.msra.mxu0 0
        %1817 = vmatprep.subr.bf16.mxu0 0
        %1818 = vmatpush2.bf16.msra.mxu0 0
        %1819 = vmatprep.subr.bf16.mxu0 0
        %1820 = vmatpush2.bf16.msra.mxu0 0
        %1821 = vmatprep.subr.bf16.mxu0 0
        %1822 = vmatpush2.bf16.msra.mxu0 0
        %1823 = vmatprep.subr.bf16.mxu0 0
        %1824 = vmatpush2.bf16.msra.mxu0 0
        %1825 = vmatprep.subr.bf16.mxu0 0
        %1826 = vmatpush2.bf16.msra.mxu0 0
        %1827 = vmatprep.subr.bf16.mxu0 0
        %1828 = vmatpush2.bf16.msra.mxu0 0
        %1829 = vmatprep.subr.bf16.mxu0 0
        %1830 = vmatpush2.bf16.msra.mxu0 0
        %1831 = vmatprep.mubr.bf16.mxu0 0
        %1832 = vmatmul.mubr.bf16.gmra.mxu0 %v1797
        %v1833 = vpop.f32.mrf.mxu0
        %v1834 = vadd.f32 0.0, %v1833
        %v1835 = vpop.f32.mrf.mxu0
        %v1836 = vpop.f32.mrf.mxu0
        %v1837 = vadd.f32 0.0, %v1836
        %v1838 = vpop.f32.mrf.mxu0
        %1839 = vdwg.mxu0
        %1840 = vst.msk [vmem:[%s280] sm:$0xff] %vm1197, %v1834
        %1841 = vst.msk [vmem:[%s280 + $0x8] sm:$0xff] %vm1197, %v1837
      $region60: #{tpu_custom_call.1} parent=43 // pred_fallthru
        _
      %s1842 = smul.u32 2, %s23
      %p1843 = scmp.lt.s32.totalorder %s22, 1
      %s1844 = scalar_select %p1843, %s22, 1
      %p1845 = scmp.lt.s32.totalorder %s1842, 7
      %s1846 = scalar_select %p1845, %s1842, 7
      %s1847 = smul.addr %s1844, 8
      %s1848 = sadd.s32 %s1846, %s1847
      %s1849 = smul.addr %s1848, 8
      %s1850 = scalar_lea.vmem %s6, %s1849
      // Predicated region
      $region61: #{tpu_custom_call.1} parent=43 // pred_check
        %p1851 = pneg %p187
      $region62: #{tpu_custom_call.1} parent=43 // pred_check_branch
        %1853 = sbr.rel (%p1851) target = $region64
      $region63: #{tpu_custom_call.1} parent=43 // pred_region
        %s1854 = smul.u32 2, %s23
      $region64: #{tpu_custom_call.1} parent=43 // pred_fallthru
        _
    $region44: #{tpu_custom_call.1} parent=5 // pred_fallthru
      _
    %p1855 = scmp.le.s32.totalorder 2, %s12
    // Predicated region
    $region65: #{tpu_custom_call.1} parent=5 // pred_check
      %p1856 = pneg %p1855
    $region66: #{tpu_custom_call.1} parent=5 // pred_check_branch
      %1858 = sbr.rel (%p1856) target = $region68
    $region67: #{tpu_custom_call.1} parent=5 // pred_region
      %s1859 = ssub.s32 %s12, 2
      // Predicated region
      $region69: #{tpu_custom_call.1} parent=67 // pred_check
        %p1860 = pneg %p193
      $region70: #{tpu_custom_call.1} parent=67 // pred_check_branch
        %1862 = sbr.rel (%p1860) target = $region72
      $region71: #{tpu_custom_call.1} parent=67 // pred_region
        %s1863 = smul.u32 2, %s26
        %p1864 = scmp.lt.s32.totalorder %s25, 1
        %s1865 = scalar_select %p1864, %s25, 1
        %p1866 = scmp.lt.s32.totalorder %s1863, 7
        %s1867 = scalar_select %p1866, %s1863, 7
        %s1868 = smul.addr %s1865, 8
        %s1869 = sadd.s32 %s1867, %s1868
        %s1870 = smul.addr %s1869, 8
        %s1871 = scalar_lea.vmem %s6, %s1870
      $region72: #{tpu_custom_call.1} parent=67 // pred_fallthru
        _
    $region68: #{tpu_custom_call.1} parent=5 // pred_fallthru
      _
  $region6: #{tpu_custom_call.1} parent=0 // loop_footer
    %s16 = sadd.s32 1, %s12
  $region7: #{tpu_custom_call.1} parent=0 // loop_footer_branch
    %11 = sbr.rel target = $region3
  $region8: #{tpu_custom_call.1} parent=0 // loop_exit
    _

</llo_original>
